<compile_context>
chip_gen: v7x
topology: tpu7x:2x2x1
jax: 0.10.0
libtpu: 0.0.40
codegen_flags: <defaults>
</compile_context>

<pallas_src>
import functools
import math

import jax
import jax.numpy as jnp
import numpy as np
from jax.experimental import pallas as pl
from jax.experimental.pallas import tpu as pltpu


# ----------------------------------------------------------------------------
# Fused Pallas kernel: conv1+GN -> conv2+GN -> fc1(ReLU) -> fc2
# ----------------------------------------------------------------------------
def _fused_kernel(x_ref, w1_ref, b1_ref, g1_ref, bt1_ref,
                  w2_ref, b2_ref, g2_ref, bt2_ref,
                  wf1_ref, bf1_ref, wf2_ref, bf2_ref,
                  emb_ref, y_ref, *, inv_n1, inv_n2):
    x = x_ref[...]                                            # (bb, Cin*H*W)

    # --- conv1 (folded dense matmul) + bias + ReLU ---------------------------
    a = jnp.dot(x, w1_ref[...], preferred_element_type=jnp.float32)
    a = jnp.maximum(a + b1_ref[...], 0.0)                     # (bb, P1); padded cols are 0

    # --- GroupNorm(1, C1): per sample over all true H*W*C1 elems, single pass
    s1 = jnp.sum(a, axis=1, keepdims=True)
    q1 = jnp.sum(a * a, axis=1, keepdims=True)
    mean1 = s1 * inv_n1
    var1 = q1 * inv_n1 - mean1 * mean1
    a = (a - mean1) * jax.lax.rsqrt(var1 + 1e-5)
    a = a * g1_ref[...] + bt1_ref[...]                        # padded cols -> exactly 0

    # TODO(synk): nn.Dropout is identity at inference; training-mode stochastic
    # masking of `a` (stateful RNG) is not implemented here.

    # --- conv2 (folded dense matmul) + bias + ReLU ---------------------------
    h = jnp.dot(a, w2_ref[...], preferred_element_type=jnp.float32)
    h = jnp.maximum(h + b2_ref[...], 0.0)                     # (bb, P2)

    # --- GroupNorm(1, C2), single pass ---------------------------------------
    s2 = jnp.sum(h, axis=1, keepdims=True)
    q2 = jnp.sum(h * h, axis=1, keepdims=True)
    mean2 = s2 * inv_n2
    var2 = q2 * inv_n2 - mean2 * mean2
    h = (h - mean2) * jax.lax.rsqrt(var2 + 1e-5)
    h = h * g2_ref[...] + bt2_ref[...]

    # --- fc1 + ReLU (embedding), fc2 (logits); lane-dense padded outputs -----
    e = jnp.dot(h, wf1_ref[...], preferred_element_type=jnp.float32) + bf1_ref[...]
    e = jnp.maximum(e, 0.0)                                   # (bb, 128)
    emb_ref[...] = e
    y_ref[...] = jnp.dot(e, wf2_ref[...], preferred_element_type=jnp.float32) + bf2_ref[...]


# ----------------------------------------------------------------------------
# Wrapper: one pallas_call, grid over the batch, weights resident in VMEM
# ----------------------------------------------------------------------------
def snippet_discriminator_forward(x, packed, *, block_b=None):
    B = x.shape[0]
    x_flat = x.reshape(B, -1)               # contiguous NCHW flatten (c, h, w) order
    kin = x_flat.shape[1]
    if block_b is None:
        block_b = B if B < 8 else 8         # tunable; scale up with larger batches
    assert B % block_b == 0, "batch must be divisible by the batch block"

    pe = packed["wf1"].shape[1]             # padded embedding width (128)
    py = packed["wf2"].shape[1]             # padded logits width (128)

    kernel = functools.partial(_fused_kernel,
                               inv_n1=packed["inv_n1"], inv_n2=packed["inv_n2"])

    def wspec(arr):
        # Full-array block, constant block index -> DMA'd into VMEM once.
        return pl.BlockSpec(arr.shape, lambda i: (0, 0))

    weights = (packed["w1"], packed["b1"], packed["g1"], packed["bt1"],
               packed["w2"], packed["b2"], packed["g2"], packed["bt2"],
               packed["wf1"], packed["bf1"], packed["wf2"], packed["bf2"])

    emb_p, y_p = pl.pallas_call(
        kernel,
        out_shape=(jax.ShapeDtypeStruct((B, pe), jnp.float32),
                   jax.ShapeDtypeStruct((B, py), jnp.float32)),
        grid=(B // block_b,),
        in_specs=[pl.BlockSpec((block_b, kin), lambda i: (i, 0))]
                 + [wspec(w) for w in weights],
        out_specs=(pl.BlockSpec((block_b, pe), lambda i: (i, 0)),
                   pl.BlockSpec((block_b, py), lambda i: (i, 0))),
        compiler_params=pltpu.CompilerParams(
            dimension_semantics=("parallel",)),
    )(x_flat, *weights)

    # Slice the padded lane dimension back to the true widths (host-side, cheap).
    return emb_p[:, :packed["emb_dim"]], y_p[:, :packed["num_classes"]]


# ----------------------------------------------------------------------------
# One-time parameter packing: fold strided convs into dense operators, pad lanes
# ----------------------------------------------------------------------------
def _round_up(n, m):
    return ((n + m - 1) // m) * m


def pack_params(raw, in_channels, num_classes, depth, k, stride, H, W):
    """Runs once at init on the host; nothing here is on the per-forward path."""
    C1, C2 = depth, depth * 2
    Ho1, Wo1 = (H - k) // stride + 1, (W - k) // stride + 1
    Ho2, Wo2 = (Ho1 - k) // stride + 1, (Wo1 - k) // stride + 1
    L1, L2 = Ho1 * Wo1, Ho2 * Wo2
    n1, n2 = L1 * C1, L2 * C2                       # true GroupNorm element counts
    P1, P2 = _round_up(n1, 128), _round_up(n2, 128)
    E = depth * 4
    PE, PY = _round_up(E, 128), _round_up(num_classes, 128)
    kin = in_channels * H * W

    w1 = np.asarray(raw["w1"], np.float32)
    w2 = np.asarray(raw["w2"], np.float32)
    fc1_w = np.asarray(raw["fc1_w"], np.float32)
    fc2_w = np.asarray(raw["fc2_w"], np.float32)

    # conv1 as dense (Cin*H*W) x P1 operator; input is NCHW-flat (c,h,w) order,
    # output column layout is channels-last flat: (oh*Wo1 + ow)*C1 + co.
    W1 = np.zeros((kin, P1), np.float32)
    for oh in range(Ho1):
        for ow in range(Wo1):
            for co in range(C1):
                col = (oh * Wo1 + ow) * C1 + co
                for ci in range(in_channels):
                    for i in range(k):
                        for j in range(k):
                            row = ci * (H * W) + (oh * stride + i) * W + (ow * stride + j)
                            W1[row, col] = w1[co, ci, i, j]

    # conv2 as dense P1 x P2 operator over conv1's channels-last output.
    W2 = np.zeros((P1, P2), np.float32)
    for oh in range(Ho2):
        for ow in range(Wo2):
            for co in range(C2):
                col = (oh * Wo2 + ow) * C2 + co
                for ci in range(C1):
                    for i in range(k):
                        for j in range(k):
                            row = ((oh * stride + i) * Wo1 + (ow * stride + j)) * C1 + ci
                            W2[row, col] = w2[co, ci, i, j]

    # fc1: rows permuted from torch.flatten's (c, h, w) order to our (h, w, c)
    # channels-last order; output columns padded 32 -> 128.
    WF1 = np.zeros((P2, PE), np.float32)
    for oh in range(Ho2):
        for ow in range(Wo2):
            for c in range(C2):
                WF1[(oh * Wo2 + ow) * C2 + c, :E] = fc1_w[:, c * L2 + oh * Wo2 + ow]

    WF2 = np.zeros((PE, PY), np.float32)
    WF2[:E, :num_classes] = fc2_w.T

    def expand(vec, L, P):
        # per-channel vector -> per flattened (position, channel) column;
        # padded columns stay zero so padded activations remain exactly 0.
        out = np.zeros((1, P), np.float32)
        v = np.asarray(vec, np.float32)
        out[0, :L * v.shape[0]] = np.tile(v, L)
        return out

    def pad_row(vec, P):
        out = np.zeros((1, P), np.float32)
        v = np.asarray(vec, np.float32)
        out[0, :v.shape[0]] = v
        return out

    return {
        "w1": jnp.asarray(W1),
        "b1": jnp.asarray(expand(raw["b1"], L1, P1)),
        "g1": jnp.asarray(expand(raw["g1"], L1, P1)),
        "bt1": jnp.asarray(expand(raw["beta1"], L1, P1)),
        "w2": jnp.asarray(W2),
        "b2": jnp.asarray(expand(raw["b2"], L2, P2)),
        "g2": jnp.asarray(expand(raw["g2"], L2, P2)),
        "bt2": jnp.asarray(expand(raw["beta2"], L2, P2)),
        "wf1": jnp.asarray(WF1),
        "bf1": jnp.asarray(pad_row(raw["fc1_b"], PE)),
        "wf2": jnp.asarray(WF2),
        "bf2": jnp.asarray(pad_row(raw["fc2_b"], PY)),
        "inv_n1": 1.0 / float(n1),
        "inv_n2": 1.0 / float(n2),
        "emb_dim": E,
        "num_classes": num_classes,
    }


# ----------------------------------------------------------------------------
# Deterministic parameter initialization (PyTorch-like uniform bounds)
# ----------------------------------------------------------------------------
def init_raw_params(key, in_channels, num_classes, depth, k):
    ks = jax.random.split(key, 8)

    def unif(kk, shape, fan_in):
        bound = 1.0 / math.sqrt(fan_in)
        return jax.random.uniform(kk, shape, jnp.float32, -bound, bound)

    d2 = depth * 2
    fc1_in, fc1_out = d2 * 3 * 3, depth * 4
    return {
        "w1": unif(ks[0], (depth, in_channels, k, k), in_channels * k * k),
        "b1": unif(ks[1], (depth,), in_channels * k * k),
        "g1": jnp.ones((depth,), jnp.float32),
        "beta1": jnp.zeros((depth,), jnp.float32),
        "w2": unif(ks[2], (d2, depth, k, k), depth * k * k),
        "b2": unif(ks[3], (d2,), depth * k * k),
        "g2": jnp.ones((d2,), jnp.float32),
        "beta2": jnp.zeros((d2,), jnp.float32),
        "fc1_w": unif(ks[4], (fc1_out, fc1_in), fc1_in),
        "fc1_b": unif(ks[5], (fc1_out,), fc1_in),
        "fc2_w": unif(ks[6], (num_classes, fc1_out), fc1_out),
        "fc2_b": unif(ks[7], (num_classes,), fc1_out),
    }


# ----------------------------------------------------------------------------
# Pure-JAX reference (mirrors the PyTorch forward exactly) for verification
# ----------------------------------------------------------------------------
def reference_forward(x, raw, stride):
    def conv(h, w, b):
        y = jax.lax.conv_general_dilated(
            h, w, (stride, stride), "VALID",
            dimension_numbers=("NCHW", "OIHW", "NCHW"))
        return y + b[None, :, None, None]

    def gn1(h, g, bt):
        mean = h.mean(axis=(1, 2, 3), keepdims=True)
        var = h.var(axis=(1, 2, 3), keepdims=True)
        return (h - mean) / jnp.sqrt(var + 1e-5) * g[None, :, None, None] + bt[None, :, None, None]

    h = gn1(jax.nn.relu(conv(x, raw["w1"], raw["b1"])), raw["g1"], raw["beta1"])
    h = gn1(jax.nn.relu(conv(h, raw["w2"], raw["b2"])), raw["g2"], raw["beta2"])
    flat = h.reshape(h.shape[0], -1)
    emb = jax.nn.relu(flat @ raw["fc1_w"].T + raw["fc1_b"])
    y = emb @ raw["fc2_w"].T + raw["fc2_b"]
    return emb, y


if __name__ == "__main__":
    # Module config: SnippetDiscriminator(in_channels=4, num_classes=3,
    #                                     depth=8, kernel_size=3, stride=2)
    in_channels, num_classes, depth, kernel_size, stride = 4, 3, 8, 3, 2
    B, H, W = 2, 15, 15   # 15x15 -> conv1: 7x7 -> conv2: 3x3 (matches fc1 input)

    key = jax.random.PRNGKey(0)
    kx, kp = jax.random.split(key)
    x = jax.random.normal(kx, (B, in_channels, H, W), jnp.float32)

    raw = init_raw_params(kp, in_channels, num_classes, depth, kernel_size)
    packed = pack_params(raw, in_channels, num_classes, depth, kernel_size, stride, H, W)

    fwd = jax.jit(lambda xx: snippet_discriminator_forward(xx, packed))
    emb, y_hat = jax.block_until_ready(fwd(x))

    emb_ref, y_ref = reference_forward(x, raw, stride)
    assert emb.shape == (B, depth * 4) and y_hat.shape == (B, num_classes)
    assert jnp.allclose(emb, emb_ref, atol=1e-4, rtol=1e-3), "embedding mismatch"
    assert jnp.allclose(y_hat, y_ref, atol=1e-4, rtol=1e-3), "logits mismatch"

    print("KERNEL_OK")
</pallas_src>

<mosaic_0001>
module attributes {stable_mosaic.version = 11 : i64} {
  func.func @_fused_kernel(%arg0: i32, %arg1: memref<2x900xf32, #tpu.memory_space<vmem>>, %arg2: memref<900x512xf32, #tpu.memory_space<vmem>>, %arg3: memref<1x512xf32, #tpu.memory_space<vmem>>, %arg4: memref<1x512xf32, #tpu.memory_space<vmem>>, %arg5: memref<1x512xf32, #tpu.memory_space<vmem>>, %arg6: memref<512x256xf32, #tpu.memory_space<vmem>>, %arg7: memref<1x256xf32, #tpu.memory_space<vmem>>, %arg8: memref<1x256xf32, #tpu.memory_space<vmem>>, %arg9: memref<1x256xf32, #tpu.memory_space<vmem>>, %arg10: memref<256x128xf32, #tpu.memory_space<vmem>>, %arg11: memref<1x128xf32, #tpu.memory_space<vmem>>, %arg12: memref<128x128xf32, #tpu.memory_space<vmem>>, %arg13: memref<1x128xf32, #tpu.memory_space<vmem>>, %arg14: memref<2x128xf32, #tpu.memory_space<vmem>>, %arg15: memref<2x128xf32, #tpu.memory_space<vmem>>) attributes {dimension_semantics = [#tpu.dimension_semantics<parallel>], iteration_bounds = array<i64: 1>, scalar_prefetch = 0 : i64, scratch_operands = 0 : i64, tpu.core_type = #tpu.core_type<tc>, window_params = [{transform_indices = @transform_0, window_bounds = array<i64: 2, 900>}, {pipeline_mode = #tpu.pipeline_mode<synchronous>, transform_indices = @transform_1, window_bounds = array<i64: 900, 512>}, {pipeline_mode = #tpu.pipeline_mode<synchronous>, transform_indices = @transform_2, window_bounds = array<i64: 1, 512>}, {pipeline_mode = #tpu.pipeline_mode<synchronous>, transform_indices = @transform_3, window_bounds = array<i64: 1, 512>}, {pipeline_mode = #tpu.pipeline_mode<synchronous>, transform_indices = @transform_4, window_bounds = array<i64: 1, 512>}, {pipeline_mode = #tpu.pipeline_mode<synchronous>, transform_indices = @transform_5, window_bounds = array<i64: 512, 256>}, {pipeline_mode = #tpu.pipeline_mode<synchronous>, transform_indices = @transform_6, window_bounds = array<i64: 1, 256>}, {pipeline_mode = #tpu.pipeline_mode<synchronous>, transform_indices = @transform_7, window_bounds = array<i64: 1, 256>}, {pipeline_mode = #tpu.pipeline_mode<synchronous>, transform_indices = @transform_8, window_bounds = array<i64: 1, 256>}, {pipeline_mode = #tpu.pipeline_mode<synchronous>, transform_indices = @transform_9, window_bounds = array<i64: 256, 128>}, {pipeline_mode = #tpu.pipeline_mode<synchronous>, transform_indices = @transform_10, window_bounds = array<i64: 1, 128>}, {pipeline_mode = #tpu.pipeline_mode<synchronous>, transform_indices = @transform_11, window_bounds = array<i64: 128, 128>}, {pipeline_mode = #tpu.pipeline_mode<synchronous>, transform_indices = @transform_12, window_bounds = array<i64: 1, 128>}, {transform_indices = @transform_13, window_bounds = array<i64: 2, 128>}, {transform_indices = @transform_14, window_bounds = array<i64: 2, 128>}]} {
    %c0 = arith.constant 0 : index
    %c0_0 = arith.constant 0 : index
    %0 = vector.load %arg1[%c0, %c0_0] : memref<2x900xf32, #tpu.memory_space<vmem>>, vector<2x900xf32>
    %c0_1 = arith.constant 0 : index
    %c0_2 = arith.constant 0 : index
    %1 = vector.load %arg2[%c0_1, %c0_2] : memref<900x512xf32, #tpu.memory_space<vmem>>, vector<900x512xf32>
    %cst = arith.constant dense<0.000000e+00> : vector<2x512xf32>
    %2 = tpu.matmul %0, %1, %cst {dimension_numbers = #tpu.dot_dimension_numbers<[1], [0], [0], [1], [0, 0, 1, 1], [], []>} : vector<2x900xf32>, vector<900x512xf32>, vector<2x512xf32> -> vector<2x512xf32>
    %c0_3 = arith.constant 0 : index
    %c0_4 = arith.constant 0 : index
    %3 = vector.load %arg3[%c0_3, %c0_4] : memref<1x512xf32, #tpu.memory_space<vmem>>, vector<1x512xf32>
    %4 = vector.broadcast %3 : vector<1x512xf32> to vector<2x512xf32>
    %5 = arith.addf %2, %4 : vector<2x512xf32>
    %cst_5 = arith.constant 0.000000e+00 : f32
    %6 = vector.broadcast %cst_5 : f32 to vector<2x512xf32>
    %7 = arith.maximumf %5, %6 : vector<2x512xf32>
    %cst_6 = arith.constant dense<0.000000e+00> : vector<2xf32>
    %8 = vector.multi_reduction <add>, %7, %cst_6 [1] : vector<2x512xf32> to vector<2xf32>
    %9 = vector.shape_cast %8 : vector<2xf32> to vector<2x1xf32>
    %10 = arith.mulf %7, %7 : vector<2x512xf32>
    %cst_7 = arith.constant dense<0.000000e+00> : vector<2xf32>
    %11 = vector.multi_reduction <add>, %10, %cst_7 [1] : vector<2x512xf32> to vector<2xf32>
    %12 = vector.shape_cast %11 : vector<2xf32> to vector<2x1xf32>
    %cst_8 = arith.constant 0.00255102036 : f32
    %13 = vector.broadcast %cst_8 : f32 to vector<2x1xf32>
    %14 = arith.mulf %9, %13 : vector<2x1xf32>
    %cst_9 = arith.constant 0.00255102036 : f32
    %15 = vector.broadcast %cst_9 : f32 to vector<2x1xf32>
    %16 = arith.mulf %12, %15 : vector<2x1xf32>
    %17 = arith.mulf %14, %14 : vector<2x1xf32>
    %18 = arith.subf %16, %17 : vector<2x1xf32>
    %19 = vector.broadcast %14 : vector<2x1xf32> to vector<2x512xf32>
    %20 = arith.subf %7, %19 : vector<2x512xf32>
    %cst_10 = arith.constant 9.99999974E-6 : f32
    %21 = vector.broadcast %cst_10 : f32 to vector<2x1xf32>
    %22 = arith.addf %18, %21 : vector<2x1xf32>
    %23 = math.rsqrt %22 : vector<2x1xf32>
    %24 = vector.broadcast %23 : vector<2x1xf32> to vector<2x512xf32>
    %25 = arith.mulf %20, %24 : vector<2x512xf32>
    %c0_11 = arith.constant 0 : index
    %c0_12 = arith.constant 0 : index
    %26 = vector.load %arg4[%c0_11, %c0_12] : memref<1x512xf32, #tpu.memory_space<vmem>>, vector<1x512xf32>
    %27 = vector.broadcast %26 : vector<1x512xf32> to vector<2x512xf32>
    %28 = arith.mulf %25, %27 : vector<2x512xf32>
    %c0_13 = arith.constant 0 : index
    %c0_14 = arith.constant 0 : index
    %29 = vector.load %arg5[%c0_13, %c0_14] : memref<1x512xf32, #tpu.memory_space<vmem>>, vector<1x512xf32>
    %30 = vector.broadcast %29 : vector<1x512xf32> to vector<2x512xf32>
    %31 = arith.addf %28, %30 : vector<2x512xf32>
    %c0_15 = arith.constant 0 : index
    %c0_16 = arith.constant 0 : index
    %32 = vector.load %arg6[%c0_15, %c0_16] : memref<512x256xf32, #tpu.memory_space<vmem>>, vector<512x256xf32>
    %cst_17 = arith.constant dense<0.000000e+00> : vector<2x256xf32>
    %33 = tpu.matmul %31, %32, %cst_17 {dimension_numbers = #tpu.dot_dimension_numbers<[1], [0], [0], [1], [0, 0, 1, 1], [], []>} : vector<2x512xf32>, vector<512x256xf32>, vector<2x256xf32> -> vector<2x256xf32>
    %c0_18 = arith.constant 0 : index
    %c0_19 = arith.constant 0 : index
    %34 = vector.load %arg7[%c0_18, %c0_19] : memref<1x256xf32, #tpu.memory_space<vmem>>, vector<1x256xf32>
    %35 = vector.broadcast %34 : vector<1x256xf32> to vector<2x256xf32>
    %36 = arith.addf %33, %35 : vector<2x256xf32>
    %cst_20 = arith.constant 0.000000e+00 : f32
    %37 = vector.broadcast %cst_20 : f32 to vector<2x256xf32>
    %38 = arith.maximumf %36, %37 : vector<2x256xf32>
    %cst_21 = arith.constant dense<0.000000e+00> : vector<2xf32>
    %39 = vector.multi_reduction <add>, %38, %cst_21 [1] : vector<2x256xf32> to vector<2xf32>
    %40 = vector.shape_cast %39 : vector<2xf32> to vector<2x1xf32>
    %41 = arith.mulf %38, %38 : vector<2x256xf32>
    %cst_22 = arith.constant dense<0.000000e+00> : vector<2xf32>
    %42 = vector.multi_reduction <add>, %41, %cst_22 [1] : vector<2x256xf32> to vector<2xf32>
    %43 = vector.shape_cast %42 : vector<2xf32> to vector<2x1xf32>
    %cst_23 = arith.constant 0.0069444445 : f32
    %44 = vector.broadcast %cst_23 : f32 to vector<2x1xf32>
    %45 = arith.mulf %40, %44 : vector<2x1xf32>
    %cst_24 = arith.constant 0.0069444445 : f32
    %46 = vector.broadcast %cst_24 : f32 to vector<2x1xf32>
    %47 = arith.mulf %43, %46 : vector<2x1xf32>
    %48 = arith.mulf %45, %45 : vector<2x1xf32>
    %49 = arith.subf %47, %48 : vector<2x1xf32>
    %50 = vector.broadcast %45 : vector<2x1xf32> to vector<2x256xf32>
    %51 = arith.subf %38, %50 : vector<2x256xf32>
    %cst_25 = arith.constant 9.99999974E-6 : f32
    %52 = vector.broadcast %cst_25 : f32 to vector<2x1xf32>
    %53 = arith.addf %49, %52 : vector<2x1xf32>
    %54 = math.rsqrt %53 : vector<2x1xf32>
    %55 = vector.broadcast %54 : vector<2x1xf32> to vector<2x256xf32>
    %56 = arith.mulf %51, %55 : vector<2x256xf32>
    %c0_26 = arith.constant 0 : index
    %c0_27 = arith.constant 0 : index
    %57 = vector.load %arg8[%c0_26, %c0_27] : memref<1x256xf32, #tpu.memory_space<vmem>>, vector<1x256xf32>
    %58 = vector.broadcast %57 : vector<1x256xf32> to vector<2x256xf32>
    %59 = arith.mulf %56, %58 : vector<2x256xf32>
    %c0_28 = arith.constant 0 : index
    %c0_29 = arith.constant 0 : index
    %60 = vector.load %arg9[%c0_28, %c0_29] : memref<1x256xf32, #tpu.memory_space<vmem>>, vector<1x256xf32>
    %61 = vector.broadcast %60 : vector<1x256xf32> to vector<2x256xf32>
    %62 = arith.addf %59, %61 : vector<2x256xf32>
    %c0_30 = arith.constant 0 : index
    %c0_31 = arith.constant 0 : index
    %63 = vector.load %arg10[%c0_30, %c0_31] : memref<256x128xf32, #tpu.memory_space<vmem>>, vector<256x128xf32>
    %cst_32 = arith.constant dense<0.000000e+00> : vector<2x128xf32>
    %64 = tpu.matmul %62, %63, %cst_32 {dimension_numbers = #tpu.dot_dimension_numbers<[1], [0], [0], [1], [0, 0, 1, 1], [], []>} : vector<2x256xf32>, vector<256x128xf32>, vector<2x128xf32> -> vector<2x128xf32>
    %c0_33 = arith.constant 0 : index
    %c0_34 = arith.constant 0 : index
    %65 = vector.load %arg11[%c0_33, %c0_34] : memref<1x128xf32, #tpu.memory_space<vmem>>, vector<1x128xf32>
    %66 = vector.broadcast %65 : vector<1x128xf32> to vector<2x128xf32>
    %67 = arith.addf %64, %66 : vector<2x128xf32>
    %cst_35 = arith.constant 0.000000e+00 : f32
    %68 = vector.broadcast %cst_35 : f32 to vector<2x128xf32>
    %69 = arith.maximumf %67, %68 : vector<2x128xf32>
    %c0_36 = arith.constant 0 : index
    %c0_37 = arith.constant 0 : index
    %70 = vector.load %arg14[%c0_36, %c0_37] : memref<2x128xf32, #tpu.memory_space<vmem>>, vector<2x128xf32>
    tpu.vector_store %arg14[%c0_36, %c0_37], %69 {strides = array<i32>} : memref<2x128xf32, #tpu.memory_space<vmem>>, vector<2x128xf32>,
    %c0_38 = arith.constant 0 : index
    %c0_39 = arith.constant 0 : index
    %71 = vector.load %arg12[%c0_38, %c0_39] : memref<128x128xf32, #tpu.memory_space<vmem>>, vector<128x128xf32>
    %cst_40 = arith.constant dense<0.000000e+00> : vector<2x128xf32>
    %72 = tpu.matmul %69, %71, %cst_40 {dimension_numbers = #tpu.dot_dimension_numbers<[1], [0], [0], [1], [0, 0, 1, 1], [], []>} : vector<2x128xf32>, vector<128x128xf32>, vector<2x128xf32> -> vector<2x128xf32>
    %c0_41 = arith.constant 0 : index
    %c0_42 = arith.constant 0 : index
    %73 = vector.load %arg13[%c0_41, %c0_42] : memref<1x128xf32, #tpu.memory_space<vmem>>, vector<1x128xf32>
    %74 = vector.broadcast %73 : vector<1x128xf32> to vector<2x128xf32>
    %75 = arith.addf %72, %74 : vector<2x128xf32>
    %c0_43 = arith.constant 0 : index
    %c0_44 = arith.constant 0 : index
    %76 = vector.load %arg15[%c0_43, %c0_44] : memref<2x128xf32, #tpu.memory_space<vmem>>, vector<2x128xf32>
    tpu.vector_store %arg15[%c0_43, %c0_44], %75 {strides = array<i32>} : memref<2x128xf32, #tpu.memory_space<vmem>>, vector<2x128xf32>,
    return
  }
  func.func @transform_0(%arg0: i32) -> (i32, i32) {
    %c0_i32 = arith.constant 0 : i32
    %c0_i32_0 = arith.constant 0 : i32
    return %arg0, %c0_i32 : i32, i32
  }
  func.func @transform_1(%arg0: i32) -> (i32, i32) {
    %c0_i32 = arith.constant 0 : i32
    %c0_i32_0 = arith.constant 0 : i32
    %c0_i32_1 = arith.constant 0 : i32
    return %c0_i32, %c0_i32_0 : i32, i32
  }
  func.func @transform_2(%arg0: i32) -> (i32, i32) {
    %c0_i32 = arith.constant 0 : i32
    %c0_i32_0 = arith.constant 0 : i32
    %c0_i32_1 = arith.constant 0 : i32
    return %c0_i32, %c0_i32_0 : i32, i32
  }
  func.func @transform_3(%arg0: i32) -> (i32, i32) {
    %c0_i32 = arith.constant 0 : i32
    %c0_i32_0 = arith.constant 0 : i32
    %c0_i32_1 = arith.constant 0 : i32
    return %c0_i32, %c0_i32_0 : i32, i32
  }
  func.func @transform_4(%arg0: i32) -> (i32, i32) {
    %c0_i32 = arith.constant 0 : i32
    %c0_i32_0 = arith.constant 0 : i32
    %c0_i32_1 = arith.constant 0 : i32
    return %c0_i32, %c0_i32_0 : i32, i32
  }
  func.func @transform_5(%arg0: i32) -> (i32, i32) {
    %c0_i32 = arith.constant 0 : i32
    %c0_i32_0 = arith.constant 0 : i32
    %c0_i32_1 = arith.constant 0 : i32
    return %c0_i32, %c0_i32_0 : i32, i32
  }
  func.func @transform_6(%arg0: i32) -> (i32, i32) {
    %c0_i32 = arith.constant 0 : i32
    %c0_i32_0 = arith.constant 0 : i32
    %c0_i32_1 = arith.constant 0 : i32
    return %c0_i32, %c0_i32_0 : i32, i32
  }
  func.func @transform_7(%arg0: i32) -> (i32, i32) {
    %c0_i32 = arith.constant 0 : i32
    %c0_i32_0 = arith.constant 0 : i32
    %c0_i32_1 = arith.constant 0 : i32
    return %c0_i32, %c0_i32_0 : i32, i32
  }
  func.func @transform_8(%arg0: i32) -> (i32, i32) {
    %c0_i32 = arith.constant 0 : i32
    %c0_i32_0 = arith.constant 0 : i32
    %c0_i32_1 = arith.constant 0 : i32
    return %c0_i32, %c0_i32_0 : i32, i32
  }
  func.func @transform_9(%arg0: i32) -> (i32, i32) {
    %c0_i32 = arith.constant 0 : i32
    %c0_i32_0 = arith.constant 0 : i32
    %c0_i32_1 = arith.constant 0 : i32
    return %c0_i32, %c0_i32_0 : i32, i32
  }
  func.func @transform_10(%arg0: i32) -> (i32, i32) {
    %c0_i32 = arith.constant 0 : i32
    %c0_i32_0 = arith.constant 0 : i32
    %c0_i32_1 = arith.constant 0 : i32
    return %c0_i32, %c0_i32_0 : i32, i32
  }
  func.func @transform_11(%arg0: i32) -> (i32, i32) {
    %c0_i32 = arith.constant 0 : i32
    %c0_i32_0 = arith.constant 0 : i32
    %c0_i32_1 = arith.constant 0 : i32
    return %c0_i32, %c0_i32_0 : i32, i32
  }
  func.func @transform_12(%arg0: i32) -> (i32, i32) {
    %c0_i32 = arith.constant 0 : i32
    %c0_i32_0 = arith.constant 0 : i32
    %c0_i32_1 = arith.constant 0 : i32
    return %c0_i32, %c0_i32_0 : i32, i32
  }
  func.func @transform_13(%arg0: i32) -> (i32, i32) {
    %c0_i32 = arith.constant 0 : i32
    %c0_i32_0 = arith.constant 0 : i32
    return %arg0, %c0_i32 : i32, i32
  }
  func.func @transform_14(%arg0: i32) -> (i32, i32) {
    %c0_i32 = arith.constant 0 : i32
    %c0_i32_0 = arith.constant 0 : i32
    return %arg0, %c0_i32 : i32, i32
  }
}

</mosaic_0001>

<llo_original>
// kernel: _lambda_.1
$region0: #{_lambda_.1}
  #allocation0 [shape = 'u32[]', space=smem, size = 0x4, offset = 0x4, fixed_abs, tag = 'smem constant byte address 0x4 - core index']
  #allocation1 [shape = 'u32[144,128]{1,0:T(1,128)}', space=vmem, size = 0x12000, scoped, tag = 'internal scratch']
  %s0 = inlined_call_operand.vmem [shape: f32[2,900], index: 0, kind: input, shape index: {}]
  %s1 = inlined_call_operand.hbm [shape: f32[900,512], index: 1, kind: input, shape index: {}]
  %s2 = inlined_call_operand.hbm [shape: f32[1,512], index: 2, kind: input, shape index: {}]
  %s3 = inlined_call_operand.hbm [shape: f32[1,512], index: 3, kind: input, shape index: {}]
  %s4 = inlined_call_operand.vmem [shape: f32[1,512], index: 4, kind: input, shape index: {}]
  %s5 = inlined_call_operand.hbm [shape: f32[512,256], index: 5, kind: input, shape index: {}]
  %s6 = inlined_call_operand.hbm [shape: f32[1,256], index: 6, kind: input, shape index: {}]
  %s7 = inlined_call_operand.hbm [shape: f32[1,256], index: 7, kind: input, shape index: {}]
  %s8 = inlined_call_operand.vmem [shape: f32[1,256], index: 8, kind: input, shape index: {}]
  %s9 = inlined_call_operand.hbm [shape: f32[256,128], index: 9, kind: input, shape index: {}]
  %s10 = inlined_call_operand.hbm [shape: f32[1,128], index: 10, kind: input, shape index: {}]
  %s11 = inlined_call_operand.hbm [shape: f32[128,128], index: 11, kind: input, shape index: {}]
  %s12 = inlined_call_operand.hbm [shape: f32[1,128], index: 12, kind: input, shape index: {}]
  %s13 = inlined_call_operand.hbm [shape: f32[2,128], index: 13, kind: output, shape index: {0}]
  %s14 = inlined_call_operand.hbm [shape: f32[2,128], index: 14, kind: output, shape index: {1}]
  %15 = xla_tuple %s13, %s14
  %s16 = sld [smem:[#allocation0]]
  $region110: #{_lambda_.1} parent=0
    _
  %s18 = ssub.s32 1, %s16
  %s19 = scalar_select 0, %s18, %s16
  $region1: #{_lambda_.1} parent=0
    #allocation2 [shape = 'u8[1851392]{0}', space=vmem, size = 0x1c4000, scoped, tag = 'input window, operand 1, single buffered']
    #allocation3 [shape = 's32[1]{0}', space=sflag, size = 0x4, scoped, tag = 'scoped memory for _lambda_.1']
    #allocation4 [shape = 's32[1]{0}', space=sflag, size = 0x4, scoped, tag = 'scoped memory for _lambda_.1']
    #allocation5 [shape = 'u8[2048]{0}', space=vmem, size = 0x800, scoped, tag = 'input window, operand 2, single buffered']
    #allocation6 [shape = 's32[1]{0}', space=sflag, size = 0x4, scoped, tag = 'scoped memory for _lambda_.1']
    #allocation7 [shape = 'u8[2048]{0}', space=vmem, size = 0x800, scoped, tag = 'input window, operand 3, single buffered']
    #allocation8 [shape = 'u8[524288]{0}', space=vmem, size = 0x80000, scoped, tag = 'input window, operand 5, single buffered']
    #allocation9 [shape = 's32[1]{0}', space=sflag, size = 0x4, scoped, tag = 'scoped memory for _lambda_.1']
    #allocation10 [shape = 'u8[1024]{0}', space=vmem, size = 0x400, scoped, tag = 'input window, operand 6, single buffered']
    #allocation11 [shape = 'u8[1024]{0}', space=vmem, size = 0x400, scoped, tag = 'input window, operand 7, single buffered']
    #allocation12 [shape = 's32[1]{0}', space=sflag, size = 0x4, scoped, tag = 'scoped memory for _lambda_.1']
    #allocation13 [shape = 'u8[131072]{0}', space=vmem, size = 0x20000, scoped, tag = 'input window, operand 9, single buffered']
    #allocation14 [shape = 'u8[512]{0}', space=vmem, size = 0x400, scoped, tag = 'input window, operand 10, single buffered']
    #allocation15 [shape = 's32[1]{0}', space=sflag, size = 0x4, scoped, tag = 'scoped memory for _lambda_.1']
    #allocation16 [shape = 'u8[65536]{0}', space=vmem, size = 0x10000, scoped, tag = 'input window, operand 11, single buffered']
    #allocation17 [shape = 'u8[512]{0}', space=vmem, size = 0x400, scoped, tag = 'input window, operand 12, single buffered']
    #allocation18 [shape = 's32[1]{0}', space=sflag, size = 0x4, scoped, tag = 'scoped memory for _lambda_.1']
    #allocation19 [shape = 'u8[1024]{0}', space=vmem, size = 0x400, scoped, tag = 'output window, operand 0, single buffered']
    #allocation20 [shape = 'u8[1024]{0}', space=vmem, size = 0x400, scoped, tag = 'output window, operand 1, single buffered']
    #allocation21 [shape = 's32[1]{0}', space=sflag, size = 0x4, scoped, tag = 'scoped memory for _lambda_.1']
    %20 = vsyncpa [#allocation3], 0
    %21 = vsyncpa [#allocation6], 0
    %22 = vsyncpa [#allocation9], 0
    %23 = vsyncpa [#allocation12], 0
    %24 = vsyncpa [#allocation15], 0
    %25 = vsyncpa [#allocation18], 0
    %26 = vsyncpa [#allocation4], 0
    %27 = vsyncpa [#allocation21], 0
    // Predicated region
    $region2: #{_lambda_.1} parent=1 // pred_check
      _
    $region3: #{_lambda_.1} parent=1 // pred_check_branch
      %29 = sbr.rel (0) target = $region5
    $region4: #{_lambda_.1} parent=1 // pred_region
      _
    $region5: #{_lambda_.1} parent=1 // pred_fallthru
      _
    // Predicated region
    $region6: #{_lambda_.1} parent=1 // pred_check
      _
    $region7: #{_lambda_.1} parent=1 // pred_check_branch
      %31 = sbr.rel (0) target = $region9
    $region8: #{_lambda_.1} parent=1 // pred_region
      %s33 = ssub.s32 57856, 57856
      %34 = vsyncadd [#allocation3], %s33
      %s35 = sshll.u32 [#allocation2], 4
      %s36 = int_to_ptr.vmem [resolvable:$true] %s35
      %41 = dma.hbm_to_vmem [thread:$0]  %s1, 57856, %s36, [#allocation3], 512, 512, 32
    $region9: #{_lambda_.1} parent=1 // pred_fallthru
      _
    // Predicated region
    $region10: #{_lambda_.1} parent=1 // pred_check
      _
    $region11: #{_lambda_.1} parent=1 // pred_check_branch
      %43 = sbr.rel (0) target = $region13
    $region12: #{_lambda_.1} parent=1 // pred_region
      %s45 = ssub.s32 64, 64
      %46 = vsyncadd [#allocation6], %s45
      %s48 = sshll.u32 [#allocation5], 4
      %s49 = int_to_ptr.vmem [resolvable:$true] %s48
      %51 = dma.hbm_to_vmem [thread:$0]  %s2, 64, %s49, [#allocation6]
    $region13: #{_lambda_.1} parent=1 // pred_fallthru
      _
    // Predicated region
    $region14: #{_lambda_.1} parent=1 // pred_check
      _
    $region15: #{_lambda_.1} parent=1 // pred_check_branch
      %53 = sbr.rel (0) target = $region17
    $region16: #{_lambda_.1} parent=1 // pred_region
      %s55 = ssub.s32 64, 64
      %56 = vsyncadd [#allocation6], %s55
      %s58 = sshll.u32 [#allocation7], 4
      %s59 = int_to_ptr.vmem [resolvable:$true] %s58
      %61 = dma.hbm_to_vmem [thread:$0]  %s3, 64, %s59, [#allocation6]
    $region17: #{_lambda_.1} parent=1 // pred_fallthru
      _
    // Predicated region
    $region18: #{_lambda_.1} parent=1 // pred_check
      _
    $region19: #{_lambda_.1} parent=1 // pred_check_branch
      %63 = sbr.rel (0) target = $region21
    $region20: #{_lambda_.1} parent=1 // pred_region
      _
    $region21: #{_lambda_.1} parent=1 // pred_fallthru
      _
    // Predicated region
    $region22: #{_lambda_.1} parent=1 // pred_check
      _
    $region23: #{_lambda_.1} parent=1 // pred_check_branch
      %65 = sbr.rel (0) target = $region25
    $region24: #{_lambda_.1} parent=1 // pred_region
      %s67 = ssub.s32 16384, 16384
      %68 = vsyncadd [#allocation9], %s67
      %s69 = sshll.u32 [#allocation8], 4
      %s70 = int_to_ptr.vmem [resolvable:$true] %s69
      %75 = dma.hbm_to_vmem [thread:$0]  %s5, 16384, %s70, [#allocation9], 256, 256, 16
    $region25: #{_lambda_.1} parent=1 // pred_fallthru
      _
    // Predicated region
    $region26: #{_lambda_.1} parent=1 // pred_check
      _
    $region27: #{_lambda_.1} parent=1 // pred_check_branch
      %77 = sbr.rel (0) target = $region29
    $region28: #{_lambda_.1} parent=1 // pred_region
      %s79 = ssub.s32 32, 32
      %80 = vsyncadd [#allocation9], %s79
      %s82 = sshll.u32 [#allocation10], 4
      %s83 = int_to_ptr.vmem [resolvable:$true] %s82
      %85 = dma.hbm_to_vmem [thread:$0]  %s6, 32, %s83, [#allocation9]
    $region29: #{_lambda_.1} parent=1 // pred_fallthru
      _
    // Predicated region
    $region30: #{_lambda_.1} parent=1 // pred_check
      _
    $region31: #{_lambda_.1} parent=1 // pred_check_branch
      %87 = sbr.rel (0) target = $region33
    $region32: #{_lambda_.1} parent=1 // pred_region
      %s89 = ssub.s32 32, 32
      %90 = vsyncadd [#allocation12], %s89
      %s92 = sshll.u32 [#allocation11], 4
      %s93 = int_to_ptr.vmem [resolvable:$true] %s92
      %95 = dma.hbm_to_vmem [thread:$0]  %s7, 32, %s93, [#allocation12]
    $region33: #{_lambda_.1} parent=1 // pred_fallthru
      _
    // Predicated region
    $region34: #{_lambda_.1} parent=1 // pred_check
      _
    $region35: #{_lambda_.1} parent=1 // pred_check_branch
      %97 = sbr.rel (0) target = $region37
    $region36: #{_lambda_.1} parent=1 // pred_region
      _
    $region37: #{_lambda_.1} parent=1 // pred_fallthru
      _
    // Predicated region
    $region38: #{_lambda_.1} parent=1 // pred_check
      _
    $region39: #{_lambda_.1} parent=1 // pred_check_branch
      %99 = sbr.rel (0) target = $region41
    $region40: #{_lambda_.1} parent=1 // pred_region
      %s101 = ssub.s32 4096, 4096
      %102 = vsyncadd [#allocation12], %s101
      %s103 = sshll.u32 [#allocation13], 4
      %s104 = int_to_ptr.vmem [resolvable:$true] %s103
      %109 = dma.hbm_to_vmem [thread:$0]  %s9, 4096, %s104, [#allocation12], 128, 128, 8
    $region41: #{_lambda_.1} parent=1 // pred_fallthru
      _
    // Predicated region
    $region42: #{_lambda_.1} parent=1 // pred_check
      _
    $region43: #{_lambda_.1} parent=1 // pred_check_branch
      %111 = sbr.rel (0) target = $region45
    $region44: #{_lambda_.1} parent=1 // pred_region
      %s113 = ssub.s32 16, 16
      %114 = vsyncadd [#allocation15], %s113
      %s116 = sshll.u32 [#allocation14], 4
      %s117 = int_to_ptr.vmem [resolvable:$true] %s116
      %119 = dma.hbm_to_vmem [thread:$0]  %s10, 16, %s117, [#allocation15]
    $region45: #{_lambda_.1} parent=1 // pred_fallthru
      _
    // Predicated region
    $region46: #{_lambda_.1} parent=1 // pred_check
      _
    $region47: #{_lambda_.1} parent=1 // pred_check_branch
      %121 = sbr.rel (0) target = $region49
    $region48: #{_lambda_.1} parent=1 // pred_region
      %s123 = ssub.s32 2048, 2048
      %124 = vsyncadd [#allocation15], %s123
      %s125 = sshll.u32 [#allocation16], 4
      %s126 = int_to_ptr.vmem [resolvable:$true] %s125
      %131 = dma.hbm_to_vmem [thread:$0]  %s11, 2048, %s126, [#allocation15], 128, 128, 8
    $region49: #{_lambda_.1} parent=1 // pred_fallthru
      _
    // Predicated region
    $region50: #{_lambda_.1} parent=1 // pred_check
      _
    $region51: #{_lambda_.1} parent=1 // pred_check_branch
      %133 = sbr.rel (0) target = $region53
    $region52: #{_lambda_.1} parent=1 // pred_region
      %s135 = ssub.s32 16, 16
      %136 = vsyncadd [#allocation18], %s135
      %s138 = sshll.u32 [#allocation17], 4
      %s139 = int_to_ptr.vmem [resolvable:$true] %s138
      %141 = dma.hbm_to_vmem [thread:$0]  %s12, 16, %s139, [#allocation18]
    $region53: #{_lambda_.1} parent=1 // pred_fallthru
      _
    // Predicated region
    $region54: #{_lambda_.1} parent=1 // pred_check
      _
    $region55: #{_lambda_.1} parent=1 // pred_check_branch
      %143 = sbr.rel (0) target = $region57
    $region56: #{_lambda_.1} parent=1 // pred_region
      %144 = dma.done [#allocation3], 57856
    $region57: #{_lambda_.1} parent=1 // pred_fallthru
      _
    // Predicated region
    $region58: #{_lambda_.1} parent=1 // pred_check
      _
    $region59: #{_lambda_.1} parent=1 // pred_check_branch
      %146 = sbr.rel (0) target = $region61
    $region60: #{_lambda_.1} parent=1 // pred_region
      %147 = dma.done [#allocation6], 64
    $region61: #{_lambda_.1} parent=1 // pred_fallthru
      _
    // Predicated region
    $region62: #{_lambda_.1} parent=1 // pred_check
      _
    $region63: #{_lambda_.1} parent=1 // pred_check_branch
      %149 = sbr.rel (0) target = $region65
    $region64: #{_lambda_.1} parent=1 // pred_region
      %150 = dma.done [#allocation6], 64
    $region65: #{_lambda_.1} parent=1 // pred_fallthru
      _
    // Predicated region
    $region66: #{_lambda_.1} parent=1 // pred_check
      _
    $region67: #{_lambda_.1} parent=1 // pred_check_branch
      %152 = sbr.rel (0) target = $region69
    $region68: #{_lambda_.1} parent=1 // pred_region
      %153 = dma.done [#allocation9], 16384
    $region69: #{_lambda_.1} parent=1 // pred_fallthru
      _
    // Predicated region
    $region70: #{_lambda_.1} parent=1 // pred_check
      _
    $region71: #{_lambda_.1} parent=1 // pred_check_branch
      %155 = sbr.rel (0) target = $region73
    $region72: #{_lambda_.1} parent=1 // pred_region
      %156 = dma.done [#allocation9], 32
    $region73: #{_lambda_.1} parent=1 // pred_fallthru
      _
    // Predicated region
    $region74: #{_lambda_.1} parent=1 // pred_check
      _
    $region75: #{_lambda_.1} parent=1 // pred_check_branch
      %158 = sbr.rel (0) target = $region77
    $region76: #{_lambda_.1} parent=1 // pred_region
      %159 = dma.done [#allocation12], 32
    $region77: #{_lambda_.1} parent=1 // pred_fallthru
      _
    // Predicated region
    $region78: #{_lambda_.1} parent=1 // pred_check
      _
    $region79: #{_lambda_.1} parent=1 // pred_check_branch
      %161 = sbr.rel (0) target = $region81
    $region80: #{_lambda_.1} parent=1 // pred_region
      %162 = dma.done [#allocation12], 4096
    $region81: #{_lambda_.1} parent=1 // pred_fallthru
      _
    // Predicated region
    $region82: #{_lambda_.1} parent=1 // pred_check
      _
    $region83: #{_lambda_.1} parent=1 // pred_check_branch
      %164 = sbr.rel (0) target = $region85
    $region84: #{_lambda_.1} parent=1 // pred_region
      %165 = dma.done [#allocation15], 16
    $region85: #{_lambda_.1} parent=1 // pred_fallthru
      _
    // Predicated region
    $region86: #{_lambda_.1} parent=1 // pred_check
      _
    $region87: #{_lambda_.1} parent=1 // pred_check_branch
      %167 = sbr.rel (0) target = $region89
    $region88: #{_lambda_.1} parent=1 // pred_region
      %168 = dma.done [#allocation15], 2048
    $region89: #{_lambda_.1} parent=1 // pred_fallthru
      _
    // Predicated region
    $region90: #{_lambda_.1} parent=1 // pred_check
      _
    $region91: #{_lambda_.1} parent=1 // pred_check_branch
      %170 = sbr.rel (0) target = $region93
    $region92: #{_lambda_.1} parent=1 // pred_region
      %171 = dma.done [#allocation18], 16
    $region93: #{_lambda_.1} parent=1 // pred_fallthru
      _
    %v172 = vld [vmem:[%s0] sm:$0xff]
    %v173 = vld [vmem:[%s0 + $0x8] sm:$0xff]
    %v174 = vld [vmem:[#allocation2] sm:$0xff]
    %v175 = vld [vmem:[#allocation2 + $0x8] sm:$0xff]
    %v176 = vld [vmem:[#allocation2 + $0x10] sm:$0xff]
    %v177 = vld [vmem:[#allocation2 + $0x18] sm:$0xff]
    %v178 = vld [vmem:[#allocation2 + $0x20] sm:$0xff]
    %v179 = vld [vmem:[#allocation2 + $0x28] sm:$0xff]
    %v180 = vld [vmem:[#allocation2 + $0x30] sm:$0xff]
    %v181 = vld [vmem:[#allocation2 + $0x38] sm:$0xff]
    %v182 = vld [vmem:[#allocation2 + $0x40] sm:$0xff]
    %v183 = vld [vmem:[#allocation2 + $0x48] sm:$0xff]
    %v184 = vld [vmem:[#allocation2 + $0x50] sm:$0xff]
    %v185 = vld [vmem:[#allocation2 + $0x58] sm:$0xff]
    %v186 = vld [vmem:[#allocation2 + $0x60] sm:$0xff]
    %v187 = vld [vmem:[#allocation2 + $0x68] sm:$0xff]
    %v188 = vld [vmem:[#allocation2 + $0x70] sm:$0xff]
    %v189 = vld [vmem:[#allocation2 + $0x78] sm:$0xff]
    %v190 = vld [vmem:[#allocation2 + $0x80] sm:$0xff]
    %v191 = vld [vmem:[#allocation2 + $0x88] sm:$0xff]
    %v192 = vld [vmem:[#allocation2 + $0x90] sm:$0xff]
    %v193 = vld [vmem:[#allocation2 + $0x98] sm:$0xff]
    %v194 = vld [vmem:[#allocation2 + $0xa0] sm:$0xff]
    %v195 = vld [vmem:[#allocation2 + $0xa8] sm:$0xff]
    %v196 = vld [vmem:[#allocation2 + $0xb0] sm:$0xff]
    %v197 = vld [vmem:[#allocation2 + $0xb8] sm:$0xff]
    %v198 = vld [vmem:[#allocation2 + $0xc0] sm:$0xff]
    %v199 = vld [vmem:[#allocation2 + $0xc8] sm:$0xff]
    %v200 = vld [vmem:[#allocation2 + $0xd0] sm:$0xff]
    %v201 = vld [vmem:[#allocation2 + $0xd8] sm:$0xff]
    %v202 = vld [vmem:[#allocation2 + $0xe0] sm:$0xff]
    %v203 = vld [vmem:[#allocation2 + $0xe8] sm:$0xff]
    %v204 = vld [vmem:[#allocation2 + $0xf0] sm:$0xff]
    %v205 = vld [vmem:[#allocation2 + $0xf8] sm:$0xff]
    %v206 = vld [vmem:[#allocation2 + $0x100] sm:$0xff]
    %v207 = vld [vmem:[#allocation2 + $0x108] sm:$0xff]
    %v208 = vld [vmem:[#allocation2 + $0x110] sm:$0xff]
    %v209 = vld [vmem:[#allocation2 + $0x118] sm:$0xff]
    %v210 = vld [vmem:[#allocation2 + $0x120] sm:$0xff]
    %v211 = vld [vmem:[#allocation2 + $0x128] sm:$0xff]
    %v212 = vld [vmem:[#allocation2 + $0x130] sm:$0xff]
    %v213 = vld [vmem:[#allocation2 + $0x138] sm:$0xff]
    %v214 = vld [vmem:[#allocation2 + $0x140] sm:$0xff]
    %v215 = vld [vmem:[#allocation2 + $0x148] sm:$0xff]
    %v216 = vld [vmem:[#allocation2 + $0x150] sm:$0xff]
    %v217 = vld [vmem:[#allocation2 + $0x158] sm:$0xff]
    %v218 = vld [vmem:[#allocation2 + $0x160] sm:$0xff]
    %v219 = vld [vmem:[#allocation2 + $0x168] sm:$0xff]
    %v220 = vld [vmem:[#allocation2 + $0x170] sm:$0xff]
    %v221 = vld [vmem:[#allocation2 + $0x178] sm:$0xff]
    %v222 = vld [vmem:[#allocation2 + $0x180] sm:$0xff]
    %v223 = vld [vmem:[#allocation2 + $0x188] sm:$0xff]
    %v224 = vld [vmem:[#allocation2 + $0x190] sm:$0xff]
    %v225 = vld [vmem:[#allocation2 + $0x198] sm:$0xff]
    %v226 = vld [vmem:[#allocation2 + $0x1a0] sm:$0xff]
    %v227 = vld [vmem:[#allocation2 + $0x1a8] sm:$0xff]
    %v228 = vld [vmem:[#allocation2 + $0x1b0] sm:$0xff]
    %v229 = vld [vmem:[#allocation2 + $0x1b8] sm:$0xff]
    %v230 = vld [vmem:[#allocation2 + $0x1c0] sm:$0xff]
    %v231 = vld [vmem:[#allocation2 + $0x1c8] sm:$0xff]
    %v232 = vld [vmem:[#allocation2 + $0x1d0] sm:$0xff]
    %v233 = vld [vmem:[#allocation2 + $0x1d8] sm:$0xff]
    %v234 = vld [vmem:[#allocation2 + $0x1e0] sm:$0xff]
    %v235 = vld [vmem:[#allocation2 + $0x1e8] sm:$0xff]
    %v236 = vld [vmem:[#allocation2 + $0x1f0] sm:$0xff]
    %v237 = vld [vmem:[#allocation2 + $0x1f8] sm:$0xff]
    %v238 = vld [vmem:[#allocation2 + $0x200] sm:$0xff]
    %v239 = vld [vmem:[#allocation2 + $0x208] sm:$0xff]
    %v240 = vld [vmem:[#allocation2 + $0x210] sm:$0xff]
    %v241 = vld [vmem:[#allocation2 + $0x218] sm:$0xff]
    %v242 = vld [vmem:[#allocation2 + $0x220] sm:$0xff]
    %v243 = vld [vmem:[#allocation2 + $0x228] sm:$0xff]
    %v244 = vld [vmem:[#allocation2 + $0x230] sm:$0xff]
    %v245 = vld [vmem:[#allocation2 + $0x238] sm:$0xff]
    %v246 = vld [vmem:[#allocation2 + $0x240] sm:$0xff]
    %v247 = vld [vmem:[#allocation2 + $0x248] sm:$0xff]
    %v248 = vld [vmem:[#allocation2 + $0x250] sm:$0xff]
    %v249 = vld [vmem:[#allocation2 + $0x258] sm:$0xff]
    %v250 = vld [vmem:[#allocation2 + $0x260] sm:$0xff]
    %v251 = vld [vmem:[#allocation2 + $0x268] sm:$0xff]
    %v252 = vld [vmem:[#allocation2 + $0x270] sm:$0xff]
    %v253 = vld [vmem:[#allocation2 + $0x278] sm:$0xff]
    %v254 = vld [vmem:[#allocation2 + $0x280] sm:$0xff]
    %v255 = vld [vmem:[#allocation2 + $0x288] sm:$0xff]
    %v256 = vld [vmem:[#allocation2 + $0x290] sm:$0xff]
    %v257 = vld [vmem:[#allocation2 + $0x298] sm:$0xff]
    %v258 = vld [vmem:[#allocation2 + $0x2a0] sm:$0xff]
    %v259 = vld [vmem:[#allocation2 + $0x2a8] sm:$0xff]
    %v260 = vld [vmem:[#allocation2 + $0x2b0] sm:$0xff]
    %v261 = vld [vmem:[#allocation2 + $0x2b8] sm:$0xff]
    %v262 = vld [vmem:[#allocation2 + $0x2c0] sm:$0xff]
    %v263 = vld [vmem:[#allocation2 + $0x2c8] sm:$0xff]
    %v264 = vld [vmem:[#allocation2 + $0x2d0] sm:$0xff]
    %v265 = vld [vmem:[#allocation2 + $0x2d8] sm:$0xff]
    %v266 = vld [vmem:[#allocation2 + $0x2e0] sm:$0xff]
    %v267 = vld [vmem:[#allocation2 + $0x2e8] sm:$0xff]
    %v268 = vld [vmem:[#allocation2 + $0x2f0] sm:$0xff]
    %v269 = vld [vmem:[#allocation2 + $0x2f8] sm:$0xff]
    %v270 = vld [vmem:[#allocation2 + $0x300] sm:$0xff]
    %v271 = vld [vmem:[#allocation2 + $0x308] sm:$0xff]
    %v272 = vld [vmem:[#allocation2 + $0x310] sm:$0xff]
    %v273 = vld [vmem:[#allocation2 + $0x318] sm:$0xff]
    %v274 = vld [vmem:[#allocation2 + $0x320] sm:$0xff]
    %v275 = vld [vmem:[#allocation2 + $0x328] sm:$0xff]
    %v276 = vld [vmem:[#allocation2 + $0x330] sm:$0xff]
    %v277 = vld [vmem:[#allocation2 + $0x338] sm:$0xff]
    %v278 = vld [vmem:[#allocation2 + $0x340] sm:$0xff]
    %v279 = vld [vmem:[#allocation2 + $0x348] sm:$0xff]
    %v280 = vld [vmem:[#allocation2 + $0x350] sm:$0xff]
    %v281 = vld [vmem:[#allocation2 + $0x358] sm:$0xff]
    %v282 = vld [vmem:[#allocation2 + $0x360] sm:$0xff]
    %v283 = vld [vmem:[#allocation2 + $0x368] sm:$0xff]
    %v284 = vld [vmem:[#allocation2 + $0x370] sm:$0xff]
    %v285 = vld [vmem:[#allocation2 + $0x378] sm:$0xff]
    %v286 = vld [vmem:[#allocation2 + $0x380] sm:$0xff]
    %v287 = vld [vmem:[#allocation2 + $0x388] sm:$0xff]
    %v288 = vld [vmem:[#allocation2 + $0x390] sm:$0xff]
    %v289 = vld [vmem:[#allocation2 + $0x398] sm:$0xff]
    %v290 = vld [vmem:[#allocation2 + $0x3a0] sm:$0xff]
    %v291 = vld [vmem:[#allocation2 + $0x3a8] sm:$0xff]
    %v292 = vld [vmem:[#allocation2 + $0x3b0] sm:$0xff]
    %v293 = vld [vmem:[#allocation2 + $0x3b8] sm:$0xff]
    %v294 = vld [vmem:[#allocation2 + $0x3c0] sm:$0xff]
    %v295 = vld [vmem:[#allocation2 + $0x3c8] sm:$0xff]
    %v296 = vld [vmem:[#allocation2 + $0x3d0] sm:$0xff]
    %v297 = vld [vmem:[#allocation2 + $0x3d8] sm:$0xff]
    %v298 = vld [vmem:[#allocation2 + $0x3e0] sm:$0xff]
    %v299 = vld [vmem:[#allocation2 + $0x3e8] sm:$0xff]
    %v300 = vld [vmem:[#allocation2 + $0x3f0] sm:$0xff]
    %v301 = vld [vmem:[#allocation2 + $0x3f8] sm:$0xff]
    %v302 = vld [vmem:[#allocation2 + $0x400] sm:$0xff]
    %v303 = vld [vmem:[#allocation2 + $0x408] sm:$0xff]
    %v304 = vld [vmem:[#allocation2 + $0x410] sm:$0xff]
    %v305 = vld [vmem:[#allocation2 + $0x418] sm:$0xff]
    %v306 = vld [vmem:[#allocation2 + $0x420] sm:$0xff]
    %v307 = vld [vmem:[#allocation2 + $0x428] sm:$0xff]
    %v308 = vld [vmem:[#allocation2 + $0x430] sm:$0xff]
    %v309 = vld [vmem:[#allocation2 + $0x438] sm:$0xff]
    %v310 = vld [vmem:[#allocation2 + $0x440] sm:$0xff]
    %v311 = vld [vmem:[#allocation2 + $0x448] sm:$0xff]
    %v312 = vld [vmem:[#allocation2 + $0x450] sm:$0xff]
    %v313 = vld [vmem:[#allocation2 + $0x458] sm:$0xff]
    %v314 = vld [vmem:[#allocation2 + $0x460] sm:$0xff]
    %v315 = vld [vmem:[#allocation2 + $0x468] sm:$0xff]
    %v316 = vld [vmem:[#allocation2 + $0x470] sm:$0xff]
    %v317 = vld [vmem:[#allocation2 + $0x478] sm:$0xff]
    %v318 = vld [vmem:[#allocation2 + $0x480] sm:$0xff]
    %v319 = vld [vmem:[#allocation2 + $0x488] sm:$0xff]
    %v320 = vld [vmem:[#allocation2 + $0x490] sm:$0xff]
    %v321 = vld [vmem:[#allocation2 + $0x498] sm:$0xff]
    %v322 = vld [vmem:[#allocation2 + $0x4a0] sm:$0xff]
    %v323 = vld [vmem:[#allocation2 + $0x4a8] sm:$0xff]
    %v324 = vld [vmem:[#allocation2 + $0x4b0] sm:$0xff]
    %v325 = vld [vmem:[#allocation2 + $0x4b8] sm:$0xff]
    %v326 = vld [vmem:[#allocation2 + $0x4c0] sm:$0xff]
    %v327 = vld [vmem:[#allocation2 + $0x4c8] sm:$0xff]
    %v328 = vld [vmem:[#allocation2 + $0x4d0] sm:$0xff]
    %v329 = vld [vmem:[#allocation2 + $0x4d8] sm:$0xff]
    %v330 = vld [vmem:[#allocation2 + $0x4e0] sm:$0xff]
    %v331 = vld [vmem:[#allocation2 + $0x4e8] sm:$0xff]
    %v332 = vld [vmem:[#allocation2 + $0x4f0] sm:$0xff]
    %v333 = vld [vmem:[#allocation2 + $0x4f8] sm:$0xff]
    %v334 = vld [vmem:[#allocation2 + $0x500] sm:$0xff]
    %v335 = vld [vmem:[#allocation2 + $0x508] sm:$0xff]
    %v336 = vld [vmem:[#allocation2 + $0x510] sm:$0xff]
    %v337 = vld [vmem:[#allocation2 + $0x518] sm:$0xff]
    %v338 = vld [vmem:[#allocation2 + $0x520] sm:$0xff]
    %v339 = vld [vmem:[#allocation2 + $0x528] sm:$0xff]
    %v340 = vld [vmem:[#allocation2 + $0x530] sm:$0xff]
    %v341 = vld [vmem:[#allocation2 + $0x538] sm:$0xff]
    %v342 = vld [vmem:[#allocation2 + $0x540] sm:$0xff]
    %v343 = vld [vmem:[#allocation2 + $0x548] sm:$0xff]
    %v344 = vld [vmem:[#allocation2 + $0x550] sm:$0xff]
    %v345 = vld [vmem:[#allocation2 + $0x558] sm:$0xff]
    %v346 = vld [vmem:[#allocation2 + $0x560] sm:$0xff]
    %v347 = vld [vmem:[#allocation2 + $0x568] sm:$0xff]
    %v348 = vld [vmem:[#allocation2 + $0x570] sm:$0xff]
    %v349 = vld [vmem:[#allocation2 + $0x578] sm:$0xff]
    %v350 = vld [vmem:[#allocation2 + $0x580] sm:$0xff]
    %v351 = vld [vmem:[#allocation2 + $0x588] sm:$0xff]
    %v352 = vld [vmem:[#allocation2 + $0x590] sm:$0xff]
    %v353 = vld [vmem:[#allocation2 + $0x598] sm:$0xff]
    %v354 = vld [vmem:[#allocation2 + $0x5a0] sm:$0xff]
    %v355 = vld [vmem:[#allocation2 + $0x5a8] sm:$0xff]
    %v356 = vld [vmem:[#allocation2 + $0x5b0] sm:$0xff]
    %v357 = vld [vmem:[#allocation2 + $0x5b8] sm:$0xff]
    %v358 = vld [vmem:[#allocation2 + $0x5c0] sm:$0xff]
    %v359 = vld [vmem:[#allocation2 + $0x5c8] sm:$0xff]
    %v360 = vld [vmem:[#allocation2 + $0x5d0] sm:$0xff]
    %v361 = vld [vmem:[#allocation2 + $0x5d8] sm:$0xff]
    %v362 = vld [vmem:[#allocation2 + $0x5e0] sm:$0xff]
    %v363 = vld [vmem:[#allocation2 + $0x5e8] sm:$0xff]
    %v364 = vld [vmem:[#allocation2 + $0x5f0] sm:$0xff]
    %v365 = vld [vmem:[#allocation2 + $0x5f8] sm:$0xff]
    %v366 = vld [vmem:[#allocation2 + $0x600] sm:$0xff]
    %v367 = vld [vmem:[#allocation2 + $0x608] sm:$0xff]
    %v368 = vld [vmem:[#allocation2 + $0x610] sm:$0xff]
    %v369 = vld [vmem:[#allocation2 + $0x618] sm:$0xff]
    %v370 = vld [vmem:[#allocation2 + $0x620] sm:$0xff]
    %v371 = vld [vmem:[#allocation2 + $0x628] sm:$0xff]
    %v372 = vld [vmem:[#allocation2 + $0x630] sm:$0xff]
    %v373 = vld [vmem:[#allocation2 + $0x638] sm:$0xff]
    %v374 = vld [vmem:[#allocation2 + $0x640] sm:$0xff]
    %v375 = vld [vmem:[#allocation2 + $0x648] sm:$0xff]
    %v376 = vld [vmem:[#allocation2 + $0x650] sm:$0xff]
    %v377 = vld [vmem:[#allocation2 + $0x658] sm:$0xff]
    %v378 = vld [vmem:[#allocation2 + $0x660] sm:$0xff]
    %v379 = vld [vmem:[#allocation2 + $0x668] sm:$0xff]
    %v380 = vld [vmem:[#allocation2 + $0x670] sm:$0xff]
    %v381 = vld [vmem:[#allocation2 + $0x678] sm:$0xff]
    %v382 = vld [vmem:[#allocation2 + $0x680] sm:$0xff]
    %v383 = vld [vmem:[#allocation2 + $0x688] sm:$0xff]
    %v384 = vld [vmem:[#allocation2 + $0x690] sm:$0xff]
    %v385 = vld [vmem:[#allocation2 + $0x698] sm:$0xff]
    %v386 = vld [vmem:[#allocation2 + $0x6a0] sm:$0xff]
    %v387 = vld [vmem:[#allocation2 + $0x6a8] sm:$0xff]
    %v388 = vld [vmem:[#allocation2 + $0x6b0] sm:$0xff]
    %v389 = vld [vmem:[#allocation2 + $0x6b8] sm:$0xff]
    %v390 = vld [vmem:[#allocation2 + $0x6c0] sm:$0xff]
    %v391 = vld [vmem:[#allocation2 + $0x6c8] sm:$0xff]
    %v392 = vld [vmem:[#allocation2 + $0x6d0] sm:$0xff]
    %v393 = vld [vmem:[#allocation2 + $0x6d8] sm:$0xff]
    %v394 = vld [vmem:[#allocation2 + $0x6e0] sm:$0xff]
    %v395 = vld [vmem:[#allocation2 + $0x6e8] sm:$0xff]
    %v396 = vld [vmem:[#allocation2 + $0x6f0] sm:$0xff]
    %v397 = vld [vmem:[#allocation2 + $0x6f8] sm:$0xff]
    %v398 = vld [vmem:[#allocation2 + $0x700] sm:$0xff]
    %v399 = vld [vmem:[#allocation2 + $0x708] sm:$0xff]
    %v400 = vld [vmem:[#allocation2 + $0x710] sm:$0xff]
    %v401 = vld [vmem:[#allocation2 + $0x718] sm:$0xff]
    %v402 = vld [vmem:[#allocation2 + $0x720] sm:$0xff]
    %v403 = vld [vmem:[#allocation2 + $0x728] sm:$0xff]
    %v404 = vld [vmem:[#allocation2 + $0x730] sm:$0xff]
    %v405 = vld [vmem:[#allocation2 + $0x738] sm:$0xff]
    %v406 = vld [vmem:[#allocation2 + $0x740] sm:$0xff]
    %v407 = vld [vmem:[#allocation2 + $0x748] sm:$0xff]
    %v408 = vld [vmem:[#allocation2 + $0x750] sm:$0xff]
    %v409 = vld [vmem:[#allocation2 + $0x758] sm:$0xff]
    %v410 = vld [vmem:[#allocation2 + $0x760] sm:$0xff]
    %v411 = vld [vmem:[#allocation2 + $0x768] sm:$0xff]
    %v412 = vld [vmem:[#allocation2 + $0x770] sm:$0xff]
    %v413 = vld [vmem:[#allocation2 + $0x778] sm:$0xff]
    %v414 = vld [vmem:[#allocation2 + $0x780] sm:$0xff]
    %v415 = vld [vmem:[#allocation2 + $0x788] sm:$0xff]
    %v416 = vld [vmem:[#allocation2 + $0x790] sm:$0xff]
    %v417 = vld [vmem:[#allocation2 + $0x798] sm:$0xff]
    %v418 = vld [vmem:[#allocation2 + $0x7a0] sm:$0xff]
    %v419 = vld [vmem:[#allocation2 + $0x7a8] sm:$0xff]
    %v420 = vld [vmem:[#allocation2 + $0x7b0] sm:$0xff]
    %v421 = vld [vmem:[#allocation2 + $0x7b8] sm:$0xff]
    %v422 = vld [vmem:[#allocation2 + $0x7c0] sm:$0xff]
    %v423 = vld [vmem:[#allocation2 + $0x7c8] sm:$0xff]
    %v424 = vld [vmem:[#allocation2 + $0x7d0] sm:$0xff]
    %v425 = vld [vmem:[#allocation2 + $0x7d8] sm:$0xff]
    %v426 = vld [vmem:[#allocation2 + $0x7e0] sm:$0xff]
    %v427 = vld [vmem:[#allocation2 + $0x7e8] sm:$0xff]
    %v428 = vld [vmem:[#allocation2 + $0x7f0] sm:$0xff]
    %v429 = vld [vmem:[#allocation2 + $0x7f8] sm:$0xff]
    %v430 = vld [vmem:[#allocation2 + $0x800] sm:$0xff]
    %v431 = vld [vmem:[#allocation2 + $0x808] sm:$0xff]
    %v432 = vld [vmem:[#allocation2 + $0x810] sm:$0xff]
    %v433 = vld [vmem:[#allocation2 + $0x818] sm:$0xff]
    %v434 = vld [vmem:[#allocation2 + $0x820] sm:$0xff]
    %v435 = vld [vmem:[#allocation2 + $0x828] sm:$0xff]
    %v436 = vld [vmem:[#allocation2 + $0x830] sm:$0xff]
    %v437 = vld [vmem:[#allocation2 + $0x838] sm:$0xff]
    %v438 = vld [vmem:[#allocation2 + $0x840] sm:$0xff]
    %v439 = vld [vmem:[#allocation2 + $0x848] sm:$0xff]
    %v440 = vld [vmem:[#allocation2 + $0x850] sm:$0xff]
    %v441 = vld [vmem:[#allocation2 + $0x858] sm:$0xff]
    %v442 = vld [vmem:[#allocation2 + $0x860] sm:$0xff]
    %v443 = vld [vmem:[#allocation2 + $0x868] sm:$0xff]
    %v444 = vld [vmem:[#allocation2 + $0x870] sm:$0xff]
    %v445 = vld [vmem:[#allocation2 + $0x878] sm:$0xff]
    %v446 = vld [vmem:[#allocation2 + $0x880] sm:$0xff]
    %v447 = vld [vmem:[#allocation2 + $0x888] sm:$0xff]
    %v448 = vld [vmem:[#allocation2 + $0x890] sm:$0xff]
    %v449 = vld [vmem:[#allocation2 + $0x898] sm:$0xff]
    %v450 = vld [vmem:[#allocation2 + $0x8a0] sm:$0xff]
    %v451 = vld [vmem:[#allocation2 + $0x8a8] sm:$0xff]
    %v452 = vld [vmem:[#allocation2 + $0x8b0] sm:$0xff]
    %v453 = vld [vmem:[#allocation2 + $0x8b8] sm:$0xff]
    %v454 = vld [vmem:[#allocation2 + $0x8c0] sm:$0xff]
    %v455 = vld [vmem:[#allocation2 + $0x8c8] sm:$0xff]
    %v456 = vld [vmem:[#allocation2 + $0x8d0] sm:$0xff]
    %v457 = vld [vmem:[#allocation2 + $0x8d8] sm:$0xff]
    %v458 = vld [vmem:[#allocation2 + $0x8e0] sm:$0xff]
    %v459 = vld [vmem:[#allocation2 + $0x8e8] sm:$0xff]
    %v460 = vld [vmem:[#allocation2 + $0x8f0] sm:$0xff]
    %v461 = vld [vmem:[#allocation2 + $0x8f8] sm:$0xff]
    %v462 = vld [vmem:[#allocation2 + $0x900] sm:$0xff]
    %v463 = vld [vmem:[#allocation2 + $0x908] sm:$0xff]
    %v464 = vld [vmem:[#allocation2 + $0x910] sm:$0xff]
    %v465 = vld [vmem:[#allocation2 + $0x918] sm:$0xff]
    %v466 = vld [vmem:[#allocation2 + $0x920] sm:$0xff]
    %v467 = vld [vmem:[#allocation2 + $0x928] sm:$0xff]
    %v468 = vld [vmem:[#allocation2 + $0x930] sm:$0xff]
    %v469 = vld [vmem:[#allocation2 + $0x938] sm:$0xff]
    %v470 = vld [vmem:[#allocation2 + $0x940] sm:$0xff]
    %v471 = vld [vmem:[#allocation2 + $0x948] sm:$0xff]
    %v472 = vld [vmem:[#allocation2 + $0x950] sm:$0xff]
    %v473 = vld [vmem:[#allocation2 + $0x958] sm:$0xff]
    %v474 = vld [vmem:[#allocation2 + $0x960] sm:$0xff]
    %v475 = vld [vmem:[#allocation2 + $0x968] sm:$0xff]
    %v476 = vld [vmem:[#allocation2 + $0x970] sm:$0xff]
    %v477 = vld [vmem:[#allocation2 + $0x978] sm:$0xff]
    %v478 = vld [vmem:[#allocation2 + $0x980] sm:$0xff]
    %v479 = vld [vmem:[#allocation2 + $0x988] sm:$0xff]
    %v480 = vld [vmem:[#allocation2 + $0x990] sm:$0xff]
    %v481 = vld [vmem:[#allocation2 + $0x998] sm:$0xff]
    %v482 = vld [vmem:[#allocation2 + $0x9a0] sm:$0xff]
    %v483 = vld [vmem:[#allocation2 + $0x9a8] sm:$0xff]
    %v484 = vld [vmem:[#allocation2 + $0x9b0] sm:$0xff]
    %v485 = vld [vmem:[#allocation2 + $0x9b8] sm:$0xff]
    %v486 = vld [vmem:[#allocation2 + $0x9c0] sm:$0xff]
    %v487 = vld [vmem:[#allocation2 + $0x9c8] sm:$0xff]
    %v488 = vld [vmem:[#allocation2 + $0x9d0] sm:$0xff]
    %v489 = vld [vmem:[#allocation2 + $0x9d8] sm:$0xff]
    %v490 = vld [vmem:[#allocation2 + $0x9e0] sm:$0xff]
    %v491 = vld [vmem:[#allocation2 + $0x9e8] sm:$0xff]
    %v492 = vld [vmem:[#allocation2 + $0x9f0] sm:$0xff]
    %v493 = vld [vmem:[#allocation2 + $0x9f8] sm:$0xff]
    %v494 = vld [vmem:[#allocation2 + $0xa00] sm:$0xff]
    %v495 = vld [vmem:[#allocation2 + $0xa08] sm:$0xff]
    %v496 = vld [vmem:[#allocation2 + $0xa10] sm:$0xff]
    %v497 = vld [vmem:[#allocation2 + $0xa18] sm:$0xff]
    %v498 = vld [vmem:[#allocation2 + $0xa20] sm:$0xff]
    %v499 = vld [vmem:[#allocation2 + $0xa28] sm:$0xff]
    %v500 = vld [vmem:[#allocation2 + $0xa30] sm:$0xff]
    %v501 = vld [vmem:[#allocation2 + $0xa38] sm:$0xff]
    %v502 = vld [vmem:[#allocation2 + $0xa40] sm:$0xff]
    %v503 = vld [vmem:[#allocation2 + $0xa48] sm:$0xff]
    %v504 = vld [vmem:[#allocation2 + $0xa50] sm:$0xff]
    %v505 = vld [vmem:[#allocation2 + $0xa58] sm:$0xff]
    %v506 = vld [vmem:[#allocation2 + $0xa60] sm:$0xff]
    %v507 = vld [vmem:[#allocation2 + $0xa68] sm:$0xff]
    %v508 = vld [vmem:[#allocation2 + $0xa70] sm:$0xff]
    %v509 = vld [vmem:[#allocation2 + $0xa78] sm:$0xff]
    %v510 = vld [vmem:[#allocation2 + $0xa80] sm:$0xff]
    %v511 = vld [vmem:[#allocation2 + $0xa88] sm:$0xff]
    %v512 = vld [vmem:[#allocation2 + $0xa90] sm:$0xff]
    %v513 = vld [vmem:[#allocation2 + $0xa98] sm:$0xff]
    %v514 = vld [vmem:[#allocation2 + $0xaa0] sm:$0xff]
    %v515 = vld [vmem:[#allocation2 + $0xaa8] sm:$0xff]
    %v516 = vld [vmem:[#allocation2 + $0xab0] sm:$0xff]
    %v517 = vld [vmem:[#allocation2 + $0xab8] sm:$0xff]
    %v518 = vld [vmem:[#allocation2 + $0xac0] sm:$0xff]
    %v519 = vld [vmem:[#allocation2 + $0xac8] sm:$0xff]
    %v520 = vld [vmem:[#allocation2 + $0xad0] sm:$0xff]
    %v521 = vld [vmem:[#allocation2 + $0xad8] sm:$0xff]
    %v522 = vld [vmem:[#allocation2 + $0xae0] sm:$0xff]
    %v523 = vld [vmem:[#allocation2 + $0xae8] sm:$0xff]
    %v524 = vld [vmem:[#allocation2 + $0xaf0] sm:$0xff]
    %v525 = vld [vmem:[#allocation2 + $0xaf8] sm:$0xff]
    %v526 = vld [vmem:[#allocation2 + $0xb00] sm:$0xff]
    %v527 = vld [vmem:[#allocation2 + $0xb08] sm:$0xff]
    %v528 = vld [vmem:[#allocation2 + $0xb10] sm:$0xff]
    %v529 = vld [vmem:[#allocation2 + $0xb18] sm:$0xff]
    %v530 = vld [vmem:[#allocation2 + $0xb20] sm:$0xff]
    %v531 = vld [vmem:[#allocation2 + $0xb28] sm:$0xff]
    %v532 = vld [vmem:[#allocation2 + $0xb30] sm:$0xff]
    %v533 = vld [vmem:[#allocation2 + $0xb38] sm:$0xff]
    %v534 = vld [vmem:[#allocation2 + $0xb40] sm:$0xff]
    %v535 = vld [vmem:[#allocation2 + $0xb48] sm:$0xff]
    %v536 = vld [vmem:[#allocation2 + $0xb50] sm:$0xff]
    %v537 = vld [vmem:[#allocation2 + $0xb58] sm:$0xff]
    %v538 = vld [vmem:[#allocation2 + $0xb60] sm:$0xff]
    %v539 = vld [vmem:[#allocation2 + $0xb68] sm:$0xff]
    %v540 = vld [vmem:[#allocation2 + $0xb70] sm:$0xff]
    %v541 = vld [vmem:[#allocation2 + $0xb78] sm:$0xff]
    %v542 = vld [vmem:[#allocation2 + $0xb80] sm:$0xff]
    %v543 = vld [vmem:[#allocation2 + $0xb88] sm:$0xff]
    %v544 = vld [vmem:[#allocation2 + $0xb90] sm:$0xff]
    %v545 = vld [vmem:[#allocation2 + $0xb98] sm:$0xff]
    %v546 = vld [vmem:[#allocation2 + $0xba0] sm:$0xff]
    %v547 = vld [vmem:[#allocation2 + $0xba8] sm:$0xff]
    %v548 = vld [vmem:[#allocation2 + $0xbb0] sm:$0xff]
    %v549 = vld [vmem:[#allocation2 + $0xbb8] sm:$0xff]
    %v550 = vld [vmem:[#allocation2 + $0xbc0] sm:$0xff]
    %v551 = vld [vmem:[#allocation2 + $0xbc8] sm:$0xff]
    %v552 = vld [vmem:[#allocation2 + $0xbd0] sm:$0xff]
    %v553 = vld [vmem:[#allocation2 + $0xbd8] sm:$0xff]
    %v554 = vld [vmem:[#allocation2 + $0xbe0] sm:$0xff]
    %v555 = vld [vmem:[#allocation2 + $0xbe8] sm:$0xff]
    %v556 = vld [vmem:[#allocation2 + $0xbf0] sm:$0xff]
    %v557 = vld [vmem:[#allocation2 + $0xbf8] sm:$0xff]
    %v558 = vld [vmem:[#allocation2 + $0xc00] sm:$0xff]
    %v559 = vld [vmem:[#allocation2 + $0xc08] sm:$0xff]
    %v560 = vld [vmem:[#allocation2 + $0xc10] sm:$0xff]
    %v561 = vld [vmem:[#allocation2 + $0xc18] sm:$0xff]
    %v562 = vld [vmem:[#allocation2 + $0xc20] sm:$0xff]
    %v563 = vld [vmem:[#allocation2 + $0xc28] sm:$0xff]
    %v564 = vld [vmem:[#allocation2 + $0xc30] sm:$0xff]
    %v565 = vld [vmem:[#allocation2 + $0xc38] sm:$0xff]
    %v566 = vld [vmem:[#allocation2 + $0xc40] sm:$0xff]
    %v567 = vld [vmem:[#allocation2 + $0xc48] sm:$0xff]
    %v568 = vld [vmem:[#allocation2 + $0xc50] sm:$0xff]
    %v569 = vld [vmem:[#allocation2 + $0xc58] sm:$0xff]
    %v570 = vld [vmem:[#allocation2 + $0xc60] sm:$0xff]
    %v571 = vld [vmem:[#allocation2 + $0xc68] sm:$0xff]
    %v572 = vld [vmem:[#allocation2 + $0xc70] sm:$0xff]
    %v573 = vld [vmem:[#allocation2 + $0xc78] sm:$0xff]
    %v574 = vld [vmem:[#allocation2 + $0xc80] sm:$0xff]
    %v575 = vld [vmem:[#allocation2 + $0xc88] sm:$0xff]
    %v576 = vld [vmem:[#allocation2 + $0xc90] sm:$0xff]
    %v577 = vld [vmem:[#allocation2 + $0xc98] sm:$0xff]
    %v578 = vld [vmem:[#allocation2 + $0xca0] sm:$0xff]
    %v579 = vld [vmem:[#allocation2 + $0xca8] sm:$0xff]
    %v580 = vld [vmem:[#allocation2 + $0xcb0] sm:$0xff]
    %v581 = vld [vmem:[#allocation2 + $0xcb8] sm:$0xff]
    %v582 = vld [vmem:[#allocation2 + $0xcc0] sm:$0xff]
    %v583 = vld [vmem:[#allocation2 + $0xcc8] sm:$0xff]
    %v584 = vld [vmem:[#allocation2 + $0xcd0] sm:$0xff]
    %v585 = vld [vmem:[#allocation2 + $0xcd8] sm:$0xff]
    %v586 = vld [vmem:[#allocation2 + $0xce0] sm:$0xff]
    %v587 = vld [vmem:[#allocation2 + $0xce8] sm:$0xff]
    %v588 = vld [vmem:[#allocation2 + $0xcf0] sm:$0xff]
    %v589 = vld [vmem:[#allocation2 + $0xcf8] sm:$0xff]
    %v590 = vld [vmem:[#allocation2 + $0xd00] sm:$0xff]
    %v591 = vld [vmem:[#allocation2 + $0xd08] sm:$0xff]
    %v592 = vld [vmem:[#allocation2 + $0xd10] sm:$0xff]
    %v593 = vld [vmem:[#allocation2 + $0xd18] sm:$0xff]
    %v594 = vld [vmem:[#allocation2 + $0xd20] sm:$0xff]
    %v595 = vld [vmem:[#allocation2 + $0xd28] sm:$0xff]
    %v596 = vld [vmem:[#allocation2 + $0xd30] sm:$0xff]
    %v597 = vld [vmem:[#allocation2 + $0xd38] sm:$0xff]
    %v598 = vld [vmem:[#allocation2 + $0xd40] sm:$0xff]
    %v599 = vld [vmem:[#allocation2 + $0xd48] sm:$0xff]
    %v600 = vld [vmem:[#allocation2 + $0xd50] sm:$0xff]
    %v601 = vld [vmem:[#allocation2 + $0xd58] sm:$0xff]
    %v602 = vld [vmem:[#allocation2 + $0xd60] sm:$0xff]
    %v603 = vld [vmem:[#allocation2 + $0xd68] sm:$0xff]
    %v604 = vld [vmem:[#allocation2 + $0xd70] sm:$0xff]
    %v605 = vld [vmem:[#allocation2 + $0xd78] sm:$0xff]
    %v606 = vld [vmem:[#allocation2 + $0xd80] sm:$0xff]
    %v607 = vld [vmem:[#allocation2 + $0xd88] sm:$0xff]
    %v608 = vld [vmem:[#allocation2 + $0xd90] sm:$0xff]
    %v609 = vld [vmem:[#allocation2 + $0xd98] sm:$0xff]
    %v610 = vld [vmem:[#allocation2 + $0xda0] sm:$0xff]
    %v611 = vld [vmem:[#allocation2 + $0xda8] sm:$0xff]
    %v612 = vld [vmem:[#allocation2 + $0xdb0] sm:$0xff]
    %v613 = vld [vmem:[#allocation2 + $0xdb8] sm:$0xff]
    %v614 = vld [vmem:[#allocation2 + $0xdc0] sm:$0xff]
    %v615 = vld [vmem:[#allocation2 + $0xdc8] sm:$0xff]
    %v616 = vld [vmem:[#allocation2 + $0xdd0] sm:$0xff]
    %v617 = vld [vmem:[#allocation2 + $0xdd8] sm:$0xff]
    %v618 = vld [vmem:[#allocation2 + $0xde0] sm:$0xff]
    %v619 = vld [vmem:[#allocation2 + $0xde8] sm:$0xff]
    %v620 = vld [vmem:[#allocation2 + $0xdf0] sm:$0xff]
    %v621 = vld [vmem:[#allocation2 + $0xdf8] sm:$0xff]
    %v622 = vld [vmem:[#allocation2 + $0xe00] sm:$0xf]
    %v623 = vld [vmem:[#allocation2 + $0xe08] sm:$0xf]
    %v624 = vld [vmem:[#allocation2 + $0xe10] sm:$0xf]
    %v625 = vld [vmem:[#allocation2 + $0xe18] sm:$0xf]
    %v626 = vld [vmem:[#allocation5] sm:$0xf]
    %v628 = vlaneseq
    %v629 = vshrl.u32 %v628, 7
    %v630 = vsub.s32 0, %v629
    %v631 = vrot.slane %v626, %v630
    %v632 = vlaneseq
    %v633 = vshrl.u32 %v632, 7
    %v634 = vsub.s32 1, %v633
    %v635 = vrot.slane %v626, %v634
    %v636 = vlaneseq
    %v637 = vshrl.u32 %v636, 7
    %v638 = vsub.s32 2, %v637
    %v639 = vrot.slane %v626, %v638
    %v640 = vlaneseq
    %v641 = vshrl.u32 %v640, 7
    %v642 = vsub.s32 3, %v641
    %v643 = vrot.slane %v626, %v642
    %v650 = vcombine.high %v172, %v172
    %v652 = vunpack.c.l.s4 1983009808
    %v653 = vunpack.c.0.s8 %v652
    %v654 = vlaneseq
    %v655 = vshrl.u32 %v654, 7
    %v656 = vsub.s32 %v653, %v655
    %v657 = vrot.slane %v172, %v656
    %v659 = vunpack.c.l.s4 1983009808
    %v660 = vunpack.c.0.s8 %v659
    %v661 = vlaneseq
    %v662 = vshrl.u32 %v661, 7
    %v663 = vsub.s32 %v660, %v662
    %v664 = vrot.slane %v650, %v663
    %v665 = vcombine.high %v657, %v657
    %v666 = vcombine.high %v664, %v664
    %v667 = vcombine.high %v173, %v173
    %v669 = vunpack.c.l.s4 1983009808
    %v670 = vunpack.c.0.s8 %v669
    %v671 = vlaneseq
    %v672 = vshrl.u32 %v671, 7
    %v673 = vsub.s32 %v670, %v672
    %v674 = vrot.slane %v173, %v673
    %v676 = vunpack.c.l.s4 1983009808
    %v677 = vunpack.c.0.s8 %v676
    %v678 = vlaneseq
    %v679 = vshrl.u32 %v678, 7
    %v680 = vsub.s32 %v677, %v679
    %v681 = vrot.slane %v667, %v680
    %v682 = vcombine.high %v674, %v674
    %v683 = vcombine.high %v681, %v681
    %vm691 = vcmask 31744
    %v692 = vsel %vm691, %v683, 0
    %vm694 = vcmask 1043456
    %v696 = vsel %vm694, %v622, 0
    %v699 = vsel %vm694, %v623, 0
    %v702 = vsel %vm694, %v624, 0
    %v705 = vsel %vm694, %v625, 0
    %707 = vmatprep.subr.mxu0 %v175
    %708 = vmatpush1.msra.mxu0 %v174
    %709 = vmatprep.subr.mxu0 %v179
    %710 = vmatpush1.msra.mxu0 %v178
    %711 = vmatprep.subr.mxu0 %v183
    %712 = vmatpush1.msra.mxu0 %v182
    %713 = vmatprep.subr.mxu0 %v187
    %714 = vmatpush1.msra.mxu0 %v186
    %715 = vmatprep.subr.mxu0 %v191
    %716 = vmatpush1.msra.mxu0 %v190
    %717 = vmatprep.subr.mxu0 %v195
    %718 = vmatpush1.msra.mxu0 %v194
    %719 = vmatprep.subr.mxu0 %v199
    %720 = vmatpush1.msra.mxu0 %v198
    %721 = vmatprep.subr.mxu0 %v203
    %722 = vmatpush1.msra.mxu0 %v202
    %723 = vmatprep.subr.mxu0 %v207
    %724 = vmatpush1.msra.mxu0 %v206
    %725 = vmatprep.subr.mxu0 %v211
    %726 = vmatpush1.msra.mxu0 %v210
    %727 = vmatprep.subr.mxu0 %v215
    %728 = vmatpush1.msra.mxu0 %v214
    %729 = vmatprep.subr.mxu0 %v219
    %730 = vmatpush1.msra.mxu0 %v218
    %731 = vmatprep.subr.mxu0 %v223
    %732 = vmatpush1.msra.mxu0 %v222
    %733 = vmatprep.subr.mxu0 %v227
    %734 = vmatpush1.msra.mxu0 %v226
    %735 = vmatprep.subr.mxu0 %v231
    %736 = vmatpush1.msra.mxu0 %v230
    %737 = vmatprep.subr.mxu0 %v235
    %738 = vmatpush1.msra.mxu0 %v234
    %739 = vmatprep.subr.mxu0 %v239
    %740 = vmatpush1.msra.mxu0 %v238
    %741 = vmatprep.subr.mxu0 %v243
    %742 = vmatpush1.msra.mxu0 %v242
    %743 = vmatprep.subr.mxu0 %v247
    %744 = vmatpush1.msra.mxu0 %v246
    %745 = vmatprep.subr.mxu0 %v251
    %746 = vmatpush1.msra.mxu0 %v250
    %747 = vmatprep.subr.mxu0 %v255
    %748 = vmatpush1.msra.mxu0 %v254
    %749 = vmatprep.subr.mxu0 %v259
    %750 = vmatpush1.msra.mxu0 %v258
    %751 = vmatprep.subr.mxu0 %v263
    %752 = vmatpush1.msra.mxu0 %v262
    %753 = vmatprep.subr.mxu0 %v267
    %754 = vmatpush1.msra.mxu0 %v266
    %755 = vmatprep.subr.mxu0 %v271
    %756 = vmatpush1.msra.mxu0 %v270
    %757 = vmatprep.subr.mxu0 %v275
    %758 = vmatpush1.msra.mxu0 %v274
    %759 = vmatprep.subr.mxu0 %v279
    %760 = vmatpush1.msra.mxu0 %v278
    %761 = vmatprep.subr.mxu0 %v283
    %762 = vmatpush1.msra.mxu0 %v282
    %763 = vmatprep.subr.mxu0 %v287
    %764 = vmatpush1.msra.mxu0 %v286
    %765 = vmatprep.subr.mxu0 %v291
    %766 = vmatpush1.msra.mxu0 %v290
    %767 = vmatprep.subr.mxu0 %v295
    %768 = vmatpush1.msra.mxu0 %v294
    %769 = vmatprep.subr.mxu0 %v299
    %770 = vmatpush1.msra.mxu0 %v298
    %771 = vmatprep.mubr.f32.mxu0 %v665
    %772 = vmatmul.mubr.f32.gmra.mrb[0].mxu0 %v657
    %v773 = vpop.f32.mrb[0].mxu0
    %v774 = vadd.f32 %v631, %v773
    %v775 = vpop.f32.mrb[0].mxu0
    %v776 = vadd.f32 %v635, %v775
    %777 = vdwg.mxu0
    %778 = vmatprep.subr.mxu0 %v303
    %779 = vmatpush1.msra.mxu0 %v302
    %780 = vmatprep.subr.mxu0 %v307
    %781 = vmatpush1.msra.mxu0 %v306
    %782 = vmatprep.subr.mxu0 %v311
    %783 = vmatpush1.msra.mxu0 %v310
    %784 = vmatprep.subr.mxu0 %v315
    %785 = vmatpush1.msra.mxu0 %v314
    %786 = vmatprep.subr.mxu0 %v319
    %787 = vmatpush1.msra.mxu0 %v318
    %788 = vmatprep.subr.mxu0 %v323
    %789 = vmatpush1.msra.mxu0 %v322
    %790 = vmatprep.subr.mxu0 %v327
    %791 = vmatpush1.msra.mxu0 %v326
    %792 = vmatprep.subr.mxu0 %v331
    %793 = vmatpush1.msra.mxu0 %v330
    %794 = vmatprep.subr.mxu0 %v335
    %795 = vmatpush1.msra.mxu0 %v334
    %796 = vmatprep.subr.mxu0 %v339
    %797 = vmatpush1.msra.mxu0 %v338
    %798 = vmatprep.subr.mxu0 %v343
    %799 = vmatpush1.msra.mxu0 %v342
    %800 = vmatprep.subr.mxu0 %v347
    %801 = vmatpush1.msra.mxu0 %v346
    %802 = vmatprep.subr.mxu0 %v351
    %803 = vmatpush1.msra.mxu0 %v350
    %804 = vmatprep.subr.mxu0 %v355
    %805 = vmatpush1.msra.mxu0 %v354
    %806 = vmatprep.subr.mxu0 %v359
    %807 = vmatpush1.msra.mxu0 %v358
    %808 = vmatprep.subr.mxu0 %v363
    %809 = vmatpush1.msra.mxu0 %v362
    %810 = vmatprep.subr.mxu0 %v367
    %811 = vmatpush1.msra.mxu0 %v366
    %812 = vmatprep.subr.mxu0 %v371
    %813 = vmatpush1.msra.mxu0 %v370
    %814 = vmatprep.subr.mxu0 %v375
    %815 = vmatpush1.msra.mxu0 %v374
    %816 = vmatprep.subr.mxu0 %v379
    %817 = vmatpush1.msra.mxu0 %v378
    %818 = vmatprep.subr.mxu0 %v383
    %819 = vmatpush1.msra.mxu0 %v382
    %820 = vmatprep.subr.mxu0 %v387
    %821 = vmatpush1.msra.mxu0 %v386
    %822 = vmatprep.subr.mxu0 %v391
    %823 = vmatpush1.msra.mxu0 %v390
    %824 = vmatprep.subr.mxu0 %v395
    %825 = vmatpush1.msra.mxu0 %v394
    %826 = vmatprep.subr.mxu0 %v399
    %827 = vmatpush1.msra.mxu0 %v398
    %828 = vmatprep.subr.mxu0 %v403
    %829 = vmatpush1.msra.mxu0 %v402
    %830 = vmatprep.subr.mxu0 %v407
    %831 = vmatpush1.msra.mxu0 %v406
    %832 = vmatprep.subr.mxu0 %v411
    %833 = vmatpush1.msra.mxu0 %v410
    %834 = vmatprep.subr.mxu0 %v415
    %835 = vmatpush1.msra.mxu0 %v414
    %836 = vmatprep.subr.mxu0 %v419
    %837 = vmatpush1.msra.mxu0 %v418
    %838 = vmatprep.subr.mxu0 %v423
    %839 = vmatpush1.msra.mxu0 %v422
    %840 = vmatprep.subr.mxu0 %v427
    %841 = vmatpush1.msra.mxu0 %v426
    %842 = vmatprep.mubr.f32.mxu0 %v666
    %843 = vmatmul.mubr.f32.gmra.mrb[0].mxu0 %v664
    %v844 = vpop.f32.mrb[0].mxu0
    %v845 = vadd.f32 %v774, %v844
    %v846 = vpop.f32.mrb[0].mxu0
    %v847 = vadd.f32 %v776, %v846
    %848 = vdwg.mxu0
    %849 = vmatprep.subr.mxu0 %v431
    %850 = vmatpush1.msra.mxu0 %v430
    %851 = vmatprep.subr.mxu0 %v435
    %852 = vmatpush1.msra.mxu0 %v434
    %853 = vmatprep.subr.mxu0 %v439
    %854 = vmatpush1.msra.mxu0 %v438
    %855 = vmatprep.subr.mxu0 %v443
    %856 = vmatpush1.msra.mxu0 %v442
    %857 = vmatprep.subr.mxu0 %v447
    %858 = vmatpush1.msra.mxu0 %v446
    %859 = vmatprep.subr.mxu0 %v451
    %860 = vmatpush1.msra.mxu0 %v450
    %861 = vmatprep.subr.mxu0 %v455
    %862 = vmatpush1.msra.mxu0 %v454
    %863 = vmatprep.subr.mxu0 %v459
    %864 = vmatpush1.msra.mxu0 %v458
    %865 = vmatprep.subr.mxu0 %v463
    %866 = vmatpush1.msra.mxu0 %v462
    %867 = vmatprep.subr.mxu0 %v467
    %868 = vmatpush1.msra.mxu0 %v466
    %869 = vmatprep.subr.mxu0 %v471
    %870 = vmatpush1.msra.mxu0 %v470
    %871 = vmatprep.subr.mxu0 %v475
    %872 = vmatpush1.msra.mxu0 %v474
    %873 = vmatprep.subr.mxu0 %v479
    %874 = vmatpush1.msra.mxu0 %v478
    %875 = vmatprep.subr.mxu0 %v483
    %876 = vmatpush1.msra.mxu0 %v482
    %877 = vmatprep.subr.mxu0 %v487
    %878 = vmatpush1.msra.mxu0 %v486
    %879 = vmatprep.subr.mxu0 %v491
    %880 = vmatpush1.msra.mxu0 %v490
    %881 = vmatprep.subr.mxu0 %v495
    %882 = vmatpush1.msra.mxu0 %v494
    %883 = vmatprep.subr.mxu0 %v499
    %884 = vmatpush1.msra.mxu0 %v498
    %885 = vmatprep.subr.mxu0 %v503
    %886 = vmatpush1.msra.mxu0 %v502
    %887 = vmatprep.subr.mxu0 %v507
    %888 = vmatpush1.msra.mxu0 %v506
    %889 = vmatprep.subr.mxu0 %v511
    %890 = vmatpush1.msra.mxu0 %v510
    %891 = vmatprep.subr.mxu0 %v515
    %892 = vmatpush1.msra.mxu0 %v514
    %893 = vmatprep.subr.mxu0 %v519
    %894 = vmatpush1.msra.mxu0 %v518
    %895 = vmatprep.subr.mxu0 %v523
    %896 = vmatpush1.msra.mxu0 %v522
    %897 = vmatprep.subr.mxu0 %v527
    %898 = vmatpush1.msra.mxu0 %v526
    %899 = vmatprep.subr.mxu0 %v531
    %900 = vmatpush1.msra.mxu0 %v530
    %901 = vmatprep.subr.mxu0 %v535
    %902 = vmatpush1.msra.mxu0 %v534
    %903 = vmatprep.subr.mxu0 %v539
    %904 = vmatpush1.msra.mxu0 %v538
    %905 = vmatprep.subr.mxu0 %v543
    %906 = vmatpush1.msra.mxu0 %v542
    %907 = vmatprep.subr.mxu0 %v547
    %908 = vmatpush1.msra.mxu0 %v546
    %909 = vmatprep.subr.mxu0 %v551
    %910 = vmatpush1.msra.mxu0 %v550
    %911 = vmatprep.subr.mxu0 %v555
    %912 = vmatpush1.msra.mxu0 %v554
    %913 = vmatprep.mubr.f32.mxu0 %v682
    %914 = vmatmul.mubr.f32.gmra.mrb[0].mxu0 %v674
    %v915 = vpop.f32.mrb[0].mxu0
    %v916 = vadd.f32 %v845, %v915
    %v917 = vpop.f32.mrb[0].mxu0
    %v918 = vadd.f32 %v847, %v917
    %919 = vdwg.mxu0
    %920 = vmatprep.subr.mxu0 %v559
    %921 = vmatpush1.msra.mxu0 %v558
    %922 = vmatprep.subr.mxu0 %v563
    %923 = vmatpush1.msra.mxu0 %v562
    %924 = vmatprep.subr.mxu0 %v567
    %925 = vmatpush1.msra.mxu0 %v566
    %926 = vmatprep.subr.mxu0 %v571
    %927 = vmatpush1.msra.mxu0 %v570
    %928 = vmatprep.subr.mxu0 %v575
    %929 = vmatpush1.msra.mxu0 %v574
    %930 = vmatprep.subr.mxu0 %v579
    %931 = vmatpush1.msra.mxu0 %v578
    %932 = vmatprep.subr.mxu0 %v583
    %933 = vmatpush1.msra.mxu0 %v582
    %934 = vmatprep.subr.mxu0 %v587
    %935 = vmatpush1.msra.mxu0 %v586
    %936 = vmatprep.subr.mxu0 %v591
    %937 = vmatpush1.msra.mxu0 %v590
    %938 = vmatprep.subr.mxu0 %v595
    %939 = vmatpush1.msra.mxu0 %v594
    %940 = vmatprep.subr.mxu0 %v599
    %941 = vmatpush1.msra.mxu0 %v598
    %942 = vmatprep.subr.mxu0 %v603
    %943 = vmatpush1.msra.mxu0 %v602
    %944 = vmatprep.subr.mxu0 %v607
    %945 = vmatpush1.msra.mxu0 %v606
    %946 = vmatprep.subr.mxu0 %v611
    %947 = vmatpush1.msra.mxu0 %v610
    %948 = vmatprep.subr.mxu0 %v615
    %949 = vmatpush1.msra.mxu0 %v614
    %950 = vmatprep.subr.mxu0 %v619
    %951 = vmatpush1.msra.mxu0 %v618
    %952 = vmatprep.subr.mxu0 %v699
    %953 = vmatpush1.msra.mxu0 %v696
    %954 = vmatprep.subr.mxu0 0.0
    %955 = vmatpush1.msra.mxu0 0.0
    %956 = vmatprep.subr.mxu0 0.0
    %957 = vmatpush1.msra.mxu0 0.0
    %958 = vmatprep.subr.mxu0 0.0
    %959 = vmatpush1.msra.mxu0 0.0
    %960 = vmatprep.subr.mxu0 0.0
    %961 = vmatpush1.msra.mxu0 0.0
    %962 = vmatprep.subr.mxu0 0.0
    %963 = vmatpush1.msra.mxu0 0.0
    %964 = vmatprep.subr.mxu0 0.0
    %965 = vmatpush1.msra.mxu0 0.0
    %966 = vmatprep.subr.mxu0 0.0
    %967 = vmatpush1.msra.mxu0 0.0
    %968 = vmatprep.subr.mxu0 0.0
    %969 = vmatpush1.msra.mxu0 0.0
    %970 = vmatprep.subr.mxu0 0.0
    %971 = vmatpush1.msra.mxu0 0.0
    %972 = vmatprep.subr.mxu0 0.0
    %973 = vmatpush1.msra.mxu0 0.0
    %974 = vmatprep.subr.mxu0 0.0
    %975 = vmatpush1.msra.mxu0 0.0
    %976 = vmatprep.subr.mxu0 0.0
    %977 = vmatpush1.msra.mxu0 0.0
    %978 = vmatprep.subr.mxu0 0.0
    %979 = vmatpush1.msra.mxu0 0.0
    %980 = vmatprep.subr.mxu0 0.0
    %981 = vmatpush1.msra.mxu0 0.0
    %982 = vmatprep.subr.mxu0 0.0
    %983 = vmatpush1.msra.mxu0 0.0
    %984 = vmatprep.mubr.f32.mxu0 %v692
    %985 = vmatmul.mubr.f32.gmra.mrb[0].mxu0 %v681
    %v986 = vpop.f32.mrb[0].mxu0
    %v987 = vadd.f32 %v916, %v986
    %v988 = vpop.f32.mrb[0].mxu0
    %v989 = vadd.f32 %v918, %v988
    %990 = vdwg.mxu0
    %991 = vmatprep.subr.mxu0 %v177
    %992 = vmatpush1.msra.mxu0 %v176
    %993 = vmatprep.subr.mxu0 %v181
    %994 = vmatpush1.msra.mxu0 %v180
    %995 = vmatprep.subr.mxu0 %v185
    %996 = vmatpush1.msra.mxu0 %v184
    %997 = vmatprep.subr.mxu0 %v189
    %998 = vmatpush1.msra.mxu0 %v188
    %999 = vmatprep.subr.mxu0 %v193
    %1000 = vmatpush1.msra.mxu0 %v192
    %1001 = vmatprep.subr.mxu0 %v197
    %1002 = vmatpush1.msra.mxu0 %v196
    %1003 = vmatprep.subr.mxu0 %v201
    %1004 = vmatpush1.msra.mxu0 %v200
    %1005 = vmatprep.subr.mxu0 %v205
    %1006 = vmatpush1.msra.mxu0 %v204
    %1007 = vmatprep.subr.mxu0 %v209
    %1008 = vmatpush1.msra.mxu0 %v208
    %1009 = vmatprep.subr.mxu0 %v213
    %1010 = vmatpush1.msra.mxu0 %v212
    %1011 = vmatprep.subr.mxu0 %v217
    %1012 = vmatpush1.msra.mxu0 %v216
    %1013 = vmatprep.subr.mxu0 %v221
    %1014 = vmatpush1.msra.mxu0 %v220
    %1015 = vmatprep.subr.mxu0 %v225
    %1016 = vmatpush1.msra.mxu0 %v224
    %1017 = vmatprep.subr.mxu0 %v229
    %1018 = vmatpush1.msra.mxu0 %v228
    %1019 = vmatprep.subr.mxu0 %v233
    %1020 = vmatpush1.msra.mxu0 %v232
    %1021 = vmatprep.subr.mxu0 %v237
    %1022 = vmatpush1.msra.mxu0 %v236
    %1023 = vmatprep.subr.mxu0 %v241
    %1024 = vmatpush1.msra.mxu0 %v240
    %1025 = vmatprep.subr.mxu0 %v245
    %1026 = vmatpush1.msra.mxu0 %v244
    %1027 = vmatprep.subr.mxu0 %v249
    %1028 = vmatpush1.msra.mxu0 %v248
    %1029 = vmatprep.subr.mxu0 %v253
    %1030 = vmatpush1.msra.mxu0 %v252
    %1031 = vmatprep.subr.mxu0 %v257
    %1032 = vmatpush1.msra.mxu0 %v256
    %1033 = vmatprep.subr.mxu0 %v261
    %1034 = vmatpush1.msra.mxu0 %v260
    %1035 = vmatprep.subr.mxu0 %v265
    %1036 = vmatpush1.msra.mxu0 %v264
    %1037 = vmatprep.subr.mxu0 %v269
    %1038 = vmatpush1.msra.mxu0 %v268
    %1039 = vmatprep.subr.mxu0 %v273
    %1040 = vmatpush1.msra.mxu0 %v272
    %1041 = vmatprep.subr.mxu0 %v277
    %1042 = vmatpush1.msra.mxu0 %v276
    %1043 = vmatprep.subr.mxu0 %v281
    %1044 = vmatpush1.msra.mxu0 %v280
    %1045 = vmatprep.subr.mxu0 %v285
    %1046 = vmatpush1.msra.mxu0 %v284
    %1047 = vmatprep.subr.mxu0 %v289
    %1048 = vmatpush1.msra.mxu0 %v288
    %1049 = vmatprep.subr.mxu0 %v293
    %1050 = vmatpush1.msra.mxu0 %v292
    %1051 = vmatprep.subr.mxu0 %v297
    %1052 = vmatpush1.msra.mxu0 %v296
    %1053 = vmatprep.subr.mxu0 %v301
    %1054 = vmatpush1.msra.mxu0 %v300
    %1055 = vmatprep.mubr.f32.mxu0 %v665
    %1056 = vmatmul.mubr.f32.gmra.mrb[0].mxu0 %v657
    %v1057 = vpop.f32.mrb[0].mxu0
    %v1058 = vadd.f32 %v639, %v1057
    %v1059 = vpop.f32.mrb[0].mxu0
    %v1060 = vadd.f32 %v643, %v1059
    %1061 = vdwg.mxu0
    %1062 = vmatprep.subr.mxu0 %v305
    %1063 = vmatpush1.msra.mxu0 %v304
    %1064 = vmatprep.subr.mxu0 %v309
    %1065 = vmatpush1.msra.mxu0 %v308
    %1066 = vmatprep.subr.mxu0 %v313
    %1067 = vmatpush1.msra.mxu0 %v312
    %1068 = vmatprep.subr.mxu0 %v317
    %1069 = vmatpush1.msra.mxu0 %v316
    %1070 = vmatprep.subr.mxu0 %v321
    %1071 = vmatpush1.msra.mxu0 %v320
    %1072 = vmatprep.subr.mxu0 %v325
    %1073 = vmatpush1.msra.mxu0 %v324
    %1074 = vmatprep.subr.mxu0 %v329
    %1075 = vmatpush1.msra.mxu0 %v328
    %1076 = vmatprep.subr.mxu0 %v333
    %1077 = vmatpush1.msra.mxu0 %v332
    %1078 = vmatprep.subr.mxu0 %v337
    %1079 = vmatpush1.msra.mxu0 %v336
    %1080 = vmatprep.subr.mxu0 %v341
    %1081 = vmatpush1.msra.mxu0 %v340
    %1082 = vmatprep.subr.mxu0 %v345
    %1083 = vmatpush1.msra.mxu0 %v344
    %1084 = vmatprep.subr.mxu0 %v349
    %1085 = vmatpush1.msra.mxu0 %v348
    %1086 = vmatprep.subr.mxu0 %v353
    %1087 = vmatpush1.msra.mxu0 %v352
    %1088 = vmatprep.subr.mxu0 %v357
    %1089 = vmatpush1.msra.mxu0 %v356
    %1090 = vmatprep.subr.mxu0 %v361
    %1091 = vmatpush1.msra.mxu0 %v360
    %1092 = vmatprep.subr.mxu0 %v365
    %1093 = vmatpush1.msra.mxu0 %v364
    %1094 = vmatprep.subr.mxu0 %v369
    %1095 = vmatpush1.msra.mxu0 %v368
    %1096 = vmatprep.subr.mxu0 %v373
    %1097 = vmatpush1.msra.mxu0 %v372
    %1098 = vmatprep.subr.mxu0 %v377
    %1099 = vmatpush1.msra.mxu0 %v376
    %1100 = vmatprep.subr.mxu0 %v381
    %1101 = vmatpush1.msra.mxu0 %v380
    %1102 = vmatprep.subr.mxu0 %v385
    %1103 = vmatpush1.msra.mxu0 %v384
    %1104 = vmatprep.subr.mxu0 %v389
    %1105 = vmatpush1.msra.mxu0 %v388
    %1106 = vmatprep.subr.mxu0 %v393
    %1107 = vmatpush1.msra.mxu0 %v392
    %1108 = vmatprep.subr.mxu0 %v397
    %1109 = vmatpush1.msra.mxu0 %v396
    %1110 = vmatprep.subr.mxu0 %v401
    %1111 = vmatpush1.msra.mxu0 %v400
    %1112 = vmatprep.subr.mxu0 %v405
    %1113 = vmatpush1.msra.mxu0 %v404
    %1114 = vmatprep.subr.mxu0 %v409
    %1115 = vmatpush1.msra.mxu0 %v408
    %1116 = vmatprep.subr.mxu0 %v413
    %1117 = vmatpush1.msra.mxu0 %v412
    %1118 = vmatprep.subr.mxu0 %v417
    %1119 = vmatpush1.msra.mxu0 %v416
    %1120 = vmatprep.subr.mxu0 %v421
    %1121 = vmatpush1.msra.mxu0 %v420
    %1122 = vmatprep.subr.mxu0 %v425
    %1123 = vmatpush1.msra.mxu0 %v424
    %1124 = vmatprep.subr.mxu0 %v429
    %1125 = vmatpush1.msra.mxu0 %v428
    %1126 = vmatprep.mubr.f32.mxu0 %v666
    %1127 = vmatmul.mubr.f32.gmra.mrb[0].mxu0 %v664
    %v1128 = vpop.f32.mrb[0].mxu0
    %v1129 = vadd.f32 %v1058, %v1128
    %v1130 = vpop.f32.mrb[0].mxu0
    %v1131 = vadd.f32 %v1060, %v1130
    %1132 = vdwg.mxu0
    %1133 = vmatprep.subr.mxu0 %v433
    %1134 = vmatpush1.msra.mxu0 %v432
    %1135 = vmatprep.subr.mxu0 %v437
    %1136 = vmatpush1.msra.mxu0 %v436
    %1137 = vmatprep.subr.mxu0 %v441
    %1138 = vmatpush1.msra.mxu0 %v440
    %1139 = vmatprep.subr.mxu0 %v445
    %1140 = vmatpush1.msra.mxu0 %v444
    %1141 = vmatprep.subr.mxu0 %v449
    %1142 = vmatpush1.msra.mxu0 %v448
    %1143 = vmatprep.subr.mxu0 %v453
    %1144 = vmatpush1.msra.mxu0 %v452
    %1145 = vmatprep.subr.mxu0 %v457
    %1146 = vmatpush1.msra.mxu0 %v456
    %1147 = vmatprep.subr.mxu0 %v461
    %1148 = vmatpush1.msra.mxu0 %v460
    %1149 = vmatprep.subr.mxu0 %v465
    %1150 = vmatpush1.msra.mxu0 %v464
    %1151 = vmatprep.subr.mxu0 %v469
    %1152 = vmatpush1.msra.mxu0 %v468
    %1153 = vmatprep.subr.mxu0 %v473
    %1154 = vmatpush1.msra.mxu0 %v472
    %1155 = vmatprep.subr.mxu0 %v477
    %1156 = vmatpush1.msra.mxu0 %v476
    %1157 = vmatprep.subr.mxu0 %v481
    %1158 = vmatpush1.msra.mxu0 %v480
    %1159 = vmatprep.subr.mxu0 %v485
    %1160 = vmatpush1.msra.mxu0 %v484
    %1161 = vmatprep.subr.mxu0 %v489
    %1162 = vmatpush1.msra.mxu0 %v488
    %1163 = vmatprep.subr.mxu0 %v493
    %1164 = vmatpush1.msra.mxu0 %v492
    %1165 = vmatprep.subr.mxu0 %v497
    %1166 = vmatpush1.msra.mxu0 %v496
    %1167 = vmatprep.subr.mxu0 %v501
    %1168 = vmatpush1.msra.mxu0 %v500
    %1169 = vmatprep.subr.mxu0 %v505
    %1170 = vmatpush1.msra.mxu0 %v504
    %1171 = vmatprep.subr.mxu0 %v509
    %1172 = vmatpush1.msra.mxu0 %v508
    %1173 = vmatprep.subr.mxu0 %v513
    %1174 = vmatpush1.msra.mxu0 %v512
    %1175 = vmatprep.subr.mxu0 %v517
    %1176 = vmatpush1.msra.mxu0 %v516
    %1177 = vmatprep.subr.mxu0 %v521
    %1178 = vmatpush1.msra.mxu0 %v520
    %1179 = vmatprep.subr.mxu0 %v525
    %1180 = vmatpush1.msra.mxu0 %v524
    %1181 = vmatprep.subr.mxu0 %v529
    %1182 = vmatpush1.msra.mxu0 %v528
    %1183 = vmatprep.subr.mxu0 %v533
    %1184 = vmatpush1.msra.mxu0 %v532
    %1185 = vmatprep.subr.mxu0 %v537
    %1186 = vmatpush1.msra.mxu0 %v536
    %1187 = vmatprep.subr.mxu0 %v541
    %1188 = vmatpush1.msra.mxu0 %v540
    %1189 = vmatprep.subr.mxu0 %v545
    %1190 = vmatpush1.msra.mxu0 %v544
    %1191 = vmatprep.subr.mxu0 %v549
    %1192 = vmatpush1.msra.mxu0 %v548
    %1193 = vmatprep.subr.mxu0 %v553
    %1194 = vmatpush1.msra.mxu0 %v552
    %1195 = vmatprep.subr.mxu0 %v557
    %1196 = vmatpush1.msra.mxu0 %v556
    %1197 = vmatprep.mubr.f32.mxu0 %v682
    %1198 = vmatmul.mubr.f32.gmra.mrb[0].mxu0 %v674
    %v1199 = vpop.f32.mrb[0].mxu0
    %v1200 = vadd.f32 %v1129, %v1199
    %v1201 = vpop.f32.mrb[0].mxu0
    %v1202 = vadd.f32 %v1131, %v1201
    %1203 = vdwg.mxu0
    %1204 = vmatprep.subr.mxu0 %v561
    %1205 = vmatpush1.msra.mxu0 %v560
    %1206 = vmatprep.subr.mxu0 %v565
    %1207 = vmatpush1.msra.mxu0 %v564
    %1208 = vmatprep.subr.mxu0 %v569
    %1209 = vmatpush1.msra.mxu0 %v568
    %1210 = vmatprep.subr.mxu0 %v573
    %1211 = vmatpush1.msra.mxu0 %v572
    %1212 = vmatprep.subr.mxu0 %v577
    %1213 = vmatpush1.msra.mxu0 %v576
    %1214 = vmatprep.subr.mxu0 %v581
    %1215 = vmatpush1.msra.mxu0 %v580
    %1216 = vmatprep.subr.mxu0 %v585
    %1217 = vmatpush1.msra.mxu0 %v584
    %1218 = vmatprep.subr.mxu0 %v589
    %1219 = vmatpush1.msra.mxu0 %v588
    %1220 = vmatprep.subr.mxu0 %v593
    %1221 = vmatpush1.msra.mxu0 %v592
    %1222 = vmatprep.subr.mxu0 %v597
    %1223 = vmatpush1.msra.mxu0 %v596
    %1224 = vmatprep.subr.mxu0 %v601
    %1225 = vmatpush1.msra.mxu0 %v600
    %1226 = vmatprep.subr.mxu0 %v605
    %1227 = vmatpush1.msra.mxu0 %v604
    %1228 = vmatprep.subr.mxu0 %v609
    %1229 = vmatpush1.msra.mxu0 %v608
    %1230 = vmatprep.subr.mxu0 %v613
    %1231 = vmatpush1.msra.mxu0 %v612
    %1232 = vmatprep.subr.mxu0 %v617
    %1233 = vmatpush1.msra.mxu0 %v616
    %1234 = vmatprep.subr.mxu0 %v621
    %1235 = vmatpush1.msra.mxu0 %v620
    %1236 = vmatprep.subr.mxu0 %v705
    %1237 = vmatpush1.msra.mxu0 %v702
    %1238 = vmatprep.subr.mxu0 0.0
    %1239 = vmatpush1.msra.mxu0 0.0
    %1240 = vmatprep.subr.mxu0 0.0
    %1241 = vmatpush1.msra.mxu0 0.0
    %1242 = vmatprep.subr.mxu0 0.0
    %1243 = vmatpush1.msra.mxu0 0.0
    %1244 = vmatprep.subr.mxu0 0.0
    %1245 = vmatpush1.msra.mxu0 0.0
    %1246 = vmatprep.subr.mxu0 0.0
    %1247 = vmatpush1.msra.mxu0 0.0
    %1248 = vmatprep.subr.mxu0 0.0
    %1249 = vmatpush1.msra.mxu0 0.0
    %1250 = vmatprep.subr.mxu0 0.0
    %1251 = vmatpush1.msra.mxu0 0.0
    %1252 = vmatprep.subr.mxu0 0.0
    %1253 = vmatpush1.msra.mxu0 0.0
    %1254 = vmatprep.subr.mxu0 0.0
    %1255 = vmatpush1.msra.mxu0 0.0
    %1256 = vmatprep.subr.mxu0 0.0
    %1257 = vmatpush1.msra.mxu0 0.0
    %1258 = vmatprep.subr.mxu0 0.0
    %1259 = vmatpush1.msra.mxu0 0.0
    %1260 = vmatprep.subr.mxu0 0.0
    %1261 = vmatpush1.msra.mxu0 0.0
    %1262 = vmatprep.subr.mxu0 0.0
    %1263 = vmatpush1.msra.mxu0 0.0
    %1264 = vmatprep.subr.mxu0 0.0
    %1265 = vmatpush1.msra.mxu0 0.0
    %1266 = vmatprep.subr.mxu0 0.0
    %1267 = vmatpush1.msra.mxu0 0.0
    %1268 = vmatprep.mubr.f32.mxu0 %v692
    %1269 = vmatmul.mubr.f32.gmra.mrb[0].mxu0 %v681
    %v1270 = vpop.f32.mrb[0].mxu0
    %v1271 = vadd.f32 %v1200, %v1270
    %v1272 = vpop.f32.mrb[0].mxu0
    %v1273 = vadd.f32 %v1202, %v1272
    %1274 = vdwg.mxu0
    %v1275 = vmax.f32 %v987, 0.0
    %v1276 = vmax.f32 %v989, 0.0
    %v1277 = vmax.f32 %v1271, 0.0
    %v1278 = vmax.f32 %v1273, 0.0
    %vm1279 = vcmask 1041408
    %v1280 = vsel %vm1279, %v1275, 0.0
    %v1281 = vsel %vm1279, %v1276, 0.0
    %v1282 = vadd.f32 %v1280, %v1281
    %v1283 = vsel %vm1279, %v1277, 0.0
    %v1284 = vadd.f32 %v1282, %v1283
    %v1285 = vsel %vm1279, %v1278, 0.0
    %v1286 = vadd.f32 %v1284, %v1285
    %1287 = vadd.xlane.f32.xlu0 %v1286
    %v1288 = vpop.xlane.xlu0 %1287
    %v1289 = vmul.f32 %v1275, %v1275
    %v1290 = vmul.f32 %v1276, %v1276
    %v1291 = vmul.f32 %v1277, %v1277
    %v1292 = vmul.f32 %v1278, %v1278
    %v1293 = vsel %vm1279, %v1289, 0.0
    %v1294 = vsel %vm1279, %v1290, 0.0
    %v1295 = vadd.f32 %v1293, %v1294
    %v1296 = vsel %vm1279, %v1291, 0.0
    %v1297 = vadd.f32 %v1295, %v1296
    %v1298 = vsel %vm1279, %v1292, 0.0
    %v1299 = vadd.f32 %v1297, %v1298
    %1300 = vadd.xlane.f32.xlu0 %v1299
    %v1301 = vpop.xlane.xlu0 %1300
    %v1302 = vmul.f32 %v1288, 0.0025510204
    %v1303 = vmul.f32 %v1301, 0.0025510204
    %v1304 = vmul.f32 %v1302, %v1302
    %v1305 = vsub.f32 %v1303, %v1304
    %v1306 = vsub.f32 %v1275, %v1302
    %v1307 = vsub.f32 %v1276, %v1302
    %v1308 = vsub.f32 %v1277, %v1302
    %v1309 = vsub.f32 %v1278, %v1302
    %v1310 = vadd.f32 %v1305, 1e-05
    %v1311 = vrsqrt.pop %v1310
    %v1312 = vmul.f32 %v1306, %v1311
    %v1313 = vmul.f32 %v1307, %v1311
    %v1314 = vmul.f32 %v1308, %v1311
    %v1315 = vmul.f32 %v1309, %v1311
    %v1316 = vld [vmem:[#allocation7] sm:$0xf]
    %v1318 = vlaneseq
    %v1319 = vshrl.u32 %v1318, 7
    %v1320 = vsub.s32 0, %v1319
    %v1321 = vrot.slane %v1316, %v1320
    %v1322 = vlaneseq
    %v1323 = vshrl.u32 %v1322, 7
    %v1324 = vsub.s32 1, %v1323
    %v1325 = vrot.slane %v1316, %v1324
    %v1326 = vlaneseq
    %v1327 = vshrl.u32 %v1326, 7
    %v1328 = vsub.s32 2, %v1327
    %v1329 = vrot.slane %v1316, %v1328
    %v1330 = vlaneseq
    %v1331 = vshrl.u32 %v1330, 7
    %v1332 = vsub.s32 3, %v1331
    %v1333 = vrot.slane %v1316, %v1332
    %v1338 = vmul.f32 %v1312, %v1321
    %v1339 = vmul.f32 %v1313, %v1325
    %v1340 = vmul.f32 %v1314, %v1329
    %v1341 = vmul.f32 %v1315, %v1333
    %v1342 = vld [vmem:[%s4] sm:$0xf]
    %v1344 = vlaneseq
    %v1345 = vshrl.u32 %v1344, 7
    %v1346 = vsub.s32 0, %v1345
    %v1347 = vrot.slane %v1342, %v1346
    %v1348 = vlaneseq
    %v1349 = vshrl.u32 %v1348, 7
    %v1350 = vsub.s32 1, %v1349
    %v1351 = vrot.slane %v1342, %v1350
    %v1352 = vlaneseq
    %v1353 = vshrl.u32 %v1352, 7
    %v1354 = vsub.s32 2, %v1353
    %v1355 = vrot.slane %v1342, %v1354
    %v1356 = vlaneseq
    %v1357 = vshrl.u32 %v1356, 7
    %v1358 = vsub.s32 3, %v1357
    %v1359 = vrot.slane %v1342, %v1358
    %v1364 = vadd.f32 %v1338, %v1347
    %v1365 = vadd.f32 %v1339, %v1351
    %v1366 = vadd.f32 %v1340, %v1355
    %v1367 = vadd.f32 %v1341, %v1359
    %v1368 = vld [vmem:[#allocation8] sm:$0xff]
    %v1369 = vld [vmem:[#allocation8 + $0x8] sm:$0xff]
    %v1370 = vld [vmem:[#allocation8 + $0x10] sm:$0xff]
    %v1371 = vld [vmem:[#allocation8 + $0x18] sm:$0xff]
    %v1372 = vld [vmem:[#allocation8 + $0x20] sm:$0xff]
    %v1373 = vld [vmem:[#allocation8 + $0x28] sm:$0xff]
    %v1374 = vld [vmem:[#allocation8 + $0x30] sm:$0xff]
    %v1375 = vld [vmem:[#allocation8 + $0x38] sm:$0xff]
    %v1376 = vld [vmem:[#allocation8 + $0x40] sm:$0xff]
    %v1377 = vld [vmem:[#allocation8 + $0x48] sm:$0xff]
    %v1378 = vld [vmem:[#allocation8 + $0x50] sm:$0xff]
    %v1379 = vld [vmem:[#allocation8 + $0x58] sm:$0xff]
    %v1380 = vld [vmem:[#allocation8 + $0x60] sm:$0xff]
    %v1381 = vld [vmem:[#allocation8 + $0x68] sm:$0xff]
    %v1382 = vld [vmem:[#allocation8 + $0x70] sm:$0xff]
    %v1383 = vld [vmem:[#allocation8 + $0x78] sm:$0xff]
    %v1384 = vld [vmem:[#allocation8 + $0x80] sm:$0xff]
    %v1385 = vld [vmem:[#allocation8 + $0x88] sm:$0xff]
    %v1386 = vld [vmem:[#allocation8 + $0x90] sm:$0xff]
    %v1387 = vld [vmem:[#allocation8 + $0x98] sm:$0xff]
    %v1388 = vld [vmem:[#allocation8 + $0xa0] sm:$0xff]
    %v1389 = vld [vmem:[#allocation8 + $0xa8] sm:$0xff]
    %v1390 = vld [vmem:[#allocation8 + $0xb0] sm:$0xff]
    %v1391 = vld [vmem:[#allocation8 + $0xb8] sm:$0xff]
    %v1392 = vld [vmem:[#allocation8 + $0xc0] sm:$0xff]
    %v1393 = vld [vmem:[#allocation8 + $0xc8] sm:$0xff]
    %v1394 = vld [vmem:[#allocation8 + $0xd0] sm:$0xff]
    %v1395 = vld [vmem:[#allocation8 + $0xd8] sm:$0xff]
    %v1396 = vld [vmem:[#allocation8 + $0xe0] sm:$0xff]
    %v1397 = vld [vmem:[#allocation8 + $0xe8] sm:$0xff]
    %v1398 = vld [vmem:[#allocation8 + $0xf0] sm:$0xff]
    %v1399 = vld [vmem:[#allocation8 + $0xf8] sm:$0xff]
    %v1400 = vld [vmem:[#allocation8 + $0x100] sm:$0xff]
    %v1401 = vld [vmem:[#allocation8 + $0x108] sm:$0xff]
    %v1402 = vld [vmem:[#allocation8 + $0x110] sm:$0xff]
    %v1403 = vld [vmem:[#allocation8 + $0x118] sm:$0xff]
    %v1404 = vld [vmem:[#allocation8 + $0x120] sm:$0xff]
    %v1405 = vld [vmem:[#allocation8 + $0x128] sm:$0xff]
    %v1406 = vld [vmem:[#allocation8 + $0x130] sm:$0xff]
    %v1407 = vld [vmem:[#allocation8 + $0x138] sm:$0xff]
    %v1408 = vld [vmem:[#allocation8 + $0x140] sm:$0xff]
    %v1409 = vld [vmem:[#allocation8 + $0x148] sm:$0xff]
    %v1410 = vld [vmem:[#allocation8 + $0x150] sm:$0xff]
    %v1411 = vld [vmem:[#allocation8 + $0x158] sm:$0xff]
    %v1412 = vld [vmem:[#allocation8 + $0x160] sm:$0xff]
    %v1413 = vld [vmem:[#allocation8 + $0x168] sm:$0xff]
    %v1414 = vld [vmem:[#allocation8 + $0x170] sm:$0xff]
    %v1415 = vld [vmem:[#allocation8 + $0x178] sm:$0xff]
    %v1416 = vld [vmem:[#allocation8 + $0x180] sm:$0xff]
    %v1417 = vld [vmem:[#allocation8 + $0x188] sm:$0xff]
    %v1418 = vld [vmem:[#allocation8 + $0x190] sm:$0xff]
    %v1419 = vld [vmem:[#allocation8 + $0x198] sm:$0xff]
    %v1420 = vld [vmem:[#allocation8 + $0x1a0] sm:$0xff]
    %v1421 = vld [vmem:[#allocation8 + $0x1a8] sm:$0xff]
    %v1422 = vld [vmem:[#allocation8 + $0x1b0] sm:$0xff]
    %v1423 = vld [vmem:[#allocation8 + $0x1b8] sm:$0xff]
    %v1424 = vld [vmem:[#allocation8 + $0x1c0] sm:$0xff]
    %v1425 = vld [vmem:[#allocation8 + $0x1c8] sm:$0xff]
    %v1426 = vld [vmem:[#allocation8 + $0x1d0] sm:$0xff]
    %v1427 = vld [vmem:[#allocation8 + $0x1d8] sm:$0xff]
    %v1428 = vld [vmem:[#allocation8 + $0x1e0] sm:$0xff]
    %v1429 = vld [vmem:[#allocation8 + $0x1e8] sm:$0xff]
    %v1430 = vld [vmem:[#allocation8 + $0x1f0] sm:$0xff]
    %v1431 = vld [vmem:[#allocation8 + $0x1f8] sm:$0xff]
    %v1432 = vld [vmem:[#allocation8 + $0x200] sm:$0xff]
    %v1433 = vld [vmem:[#allocation8 + $0x208] sm:$0xff]
    %v1434 = vld [vmem:[#allocation8 + $0x210] sm:$0xff]
    %v1435 = vld [vmem:[#allocation8 + $0x218] sm:$0xff]
    %v1436 = vld [vmem:[#allocation8 + $0x220] sm:$0xff]
    %v1437 = vld [vmem:[#allocation8 + $0x228] sm:$0xff]
    %v1438 = vld [vmem:[#allocation8 + $0x230] sm:$0xff]
    %v1439 = vld [vmem:[#allocation8 + $0x238] sm:$0xff]
    %v1440 = vld [vmem:[#allocation8 + $0x240] sm:$0xff]
    %v1441 = vld [vmem:[#allocation8 + $0x248] sm:$0xff]
    %v1442 = vld [vmem:[#allocation8 + $0x250] sm:$0xff]
    %v1443 = vld [vmem:[#allocation8 + $0x258] sm:$0xff]
    %v1444 = vld [vmem:[#allocation8 + $0x260] sm:$0xff]
    %v1445 = vld [vmem:[#allocation8 + $0x268] sm:$0xff]
    %v1446 = vld [vmem:[#allocation8 + $0x270] sm:$0xff]
    %v1447 = vld [vmem:[#allocation8 + $0x278] sm:$0xff]
    %v1448 = vld [vmem:[#allocation8 + $0x280] sm:$0xff]
    %v1449 = vld [vmem:[#allocation8 + $0x288] sm:$0xff]
    %v1450 = vld [vmem:[#allocation8 + $0x290] sm:$0xff]
    %v1451 = vld [vmem:[#allocation8 + $0x298] sm:$0xff]
    %v1452 = vld [vmem:[#allocation8 + $0x2a0] sm:$0xff]
    %v1453 = vld [vmem:[#allocation8 + $0x2a8] sm:$0xff]
    %v1454 = vld [vmem:[#allocation8 + $0x2b0] sm:$0xff]
    %v1455 = vld [vmem:[#allocation8 + $0x2b8] sm:$0xff]
    %v1456 = vld [vmem:[#allocation8 + $0x2c0] sm:$0xff]
    %v1457 = vld [vmem:[#allocation8 + $0x2c8] sm:$0xff]
    %v1458 = vld [vmem:[#allocation8 + $0x2d0] sm:$0xff]
    %v1459 = vld [vmem:[#allocation8 + $0x2d8] sm:$0xff]
    %v1460 = vld [vmem:[#allocation8 + $0x2e0] sm:$0xff]
    %v1461 = vld [vmem:[#allocation8 + $0x2e8] sm:$0xff]
    %v1462 = vld [vmem:[#allocation8 + $0x2f0] sm:$0xff]
    %v1463 = vld [vmem:[#allocation8 + $0x2f8] sm:$0xff]
    %v1464 = vld [vmem:[#allocation8 + $0x300] sm:$0xff]
    %v1465 = vld [vmem:[#allocation8 + $0x308] sm:$0xff]
    %v1466 = vld [vmem:[#allocation8 + $0x310] sm:$0xff]
    %v1467 = vld [vmem:[#allocation8 + $0x318] sm:$0xff]
    %v1468 = vld [vmem:[#allocation8 + $0x320] sm:$0xff]
    %v1469 = vld [vmem:[#allocation8 + $0x328] sm:$0xff]
    %v1470 = vld [vmem:[#allocation8 + $0x330] sm:$0xff]
    %v1471 = vld [vmem:[#allocation8 + $0x338] sm:$0xff]
    %v1472 = vld [vmem:[#allocation8 + $0x340] sm:$0xff]
    %v1473 = vld [vmem:[#allocation8 + $0x348] sm:$0xff]
    %v1474 = vld [vmem:[#allocation8 + $0x350] sm:$0xff]
    %v1475 = vld [vmem:[#allocation8 + $0x358] sm:$0xff]
    %v1476 = vld [vmem:[#allocation8 + $0x360] sm:$0xff]
    %v1477 = vld [vmem:[#allocation8 + $0x368] sm:$0xff]
    %v1478 = vld [vmem:[#allocation8 + $0x370] sm:$0xff]
    %v1479 = vld [vmem:[#allocation8 + $0x378] sm:$0xff]
    %v1480 = vld [vmem:[#allocation8 + $0x380] sm:$0xff]
    %v1481 = vld [vmem:[#allocation8 + $0x388] sm:$0xff]
    %v1482 = vld [vmem:[#allocation8 + $0x390] sm:$0xff]
    %v1483 = vld [vmem:[#allocation8 + $0x398] sm:$0xff]
    %v1484 = vld [vmem:[#allocation8 + $0x3a0] sm:$0xff]
    %v1485 = vld [vmem:[#allocation8 + $0x3a8] sm:$0xff]
    %v1486 = vld [vmem:[#allocation8 + $0x3b0] sm:$0xff]
    %v1487 = vld [vmem:[#allocation8 + $0x3b8] sm:$0xff]
    %v1488 = vld [vmem:[#allocation8 + $0x3c0] sm:$0xff]
    %v1489 = vld [vmem:[#allocation8 + $0x3c8] sm:$0xff]
    %v1490 = vld [vmem:[#allocation8 + $0x3d0] sm:$0xff]
    %v1491 = vld [vmem:[#allocation8 + $0x3d8] sm:$0xff]
    %v1492 = vld [vmem:[#allocation8 + $0x3e0] sm:$0xff]
    %v1493 = vld [vmem:[#allocation8 + $0x3e8] sm:$0xff]
    %v1494 = vld [vmem:[#allocation8 + $0x3f0] sm:$0xff]
    %v1495 = vld [vmem:[#allocation8 + $0x3f8] sm:$0xff]
    %v1496 = vld [vmem:[#allocation10] sm:$0x3]
    %v1498 = vlaneseq
    %v1499 = vshrl.u32 %v1498, 7
    %v1500 = vsub.s32 0, %v1499
    %v1501 = vrot.slane %v1496, %v1500
    %v1502 = vlaneseq
    %v1503 = vshrl.u32 %v1502, 7
    %v1504 = vsub.s32 1, %v1503
    %v1505 = vrot.slane %v1496, %v1504
    %1508 = vmatprep.subr.mxu0 %v1369
    %1509 = vmatpush1.msra.mxu0 %v1368
    %1510 = vmatprep.subr.mxu0 %v1371
    %1511 = vmatpush1.msra.mxu0 %v1370
    %1512 = vmatprep.subr.mxu0 %v1373
    %1513 = vmatpush1.msra.mxu0 %v1372
    %1514 = vmatprep.subr.mxu0 %v1375
    %1515 = vmatpush1.msra.mxu0 %v1374
    %1516 = vmatprep.subr.mxu0 %v1377
    %1517 = vmatpush1.msra.mxu0 %v1376
    %1518 = vmatprep.subr.mxu0 %v1379
    %1519 = vmatpush1.msra.mxu0 %v1378
    %1520 = vmatprep.subr.mxu0 %v1381
    %1521 = vmatpush1.msra.mxu0 %v1380
    %1522 = vmatprep.subr.mxu0 %v1383
    %1523 = vmatpush1.msra.mxu0 %v1382
    %1524 = vmatprep.subr.mxu0 %v1385
    %1525 = vmatpush1.msra.mxu0 %v1384
    %1526 = vmatprep.subr.mxu0 %v1387
    %1527 = vmatpush1.msra.mxu0 %v1386
    %1528 = vmatprep.subr.mxu0 %v1389
    %1529 = vmatpush1.msra.mxu0 %v1388
    %1530 = vmatprep.subr.mxu0 %v1391
    %1531 = vmatpush1.msra.mxu0 %v1390
    %1532 = vmatprep.subr.mxu0 %v1393
    %1533 = vmatpush1.msra.mxu0 %v1392
    %1534 = vmatprep.subr.mxu0 %v1395
    %1535 = vmatpush1.msra.mxu0 %v1394
    %1536 = vmatprep.subr.mxu0 %v1397
    %1537 = vmatpush1.msra.mxu0 %v1396
    %1538 = vmatprep.subr.mxu0 %v1399
    %1539 = vmatpush1.msra.mxu0 %v1398
    %1540 = vmatprep.subr.mxu0 %v1401
    %1541 = vmatpush1.msra.mxu0 %v1400
    %1542 = vmatprep.subr.mxu0 %v1403
    %1543 = vmatpush1.msra.mxu0 %v1402
    %1544 = vmatprep.subr.mxu0 %v1405
    %1545 = vmatpush1.msra.mxu0 %v1404
    %1546 = vmatprep.subr.mxu0 %v1407
    %1547 = vmatpush1.msra.mxu0 %v1406
    %1548 = vmatprep.subr.mxu0 %v1409
    %1549 = vmatpush1.msra.mxu0 %v1408
    %1550 = vmatprep.subr.mxu0 %v1411
    %1551 = vmatpush1.msra.mxu0 %v1410
    %1552 = vmatprep.subr.mxu0 %v1413
    %1553 = vmatpush1.msra.mxu0 %v1412
    %1554 = vmatprep.subr.mxu0 %v1415
    %1555 = vmatpush1.msra.mxu0 %v1414
    %1556 = vmatprep.subr.mxu0 %v1417
    %1557 = vmatpush1.msra.mxu0 %v1416
    %1558 = vmatprep.subr.mxu0 %v1419
    %1559 = vmatpush1.msra.mxu0 %v1418
    %1560 = vmatprep.subr.mxu0 %v1421
    %1561 = vmatpush1.msra.mxu0 %v1420
    %1562 = vmatprep.subr.mxu0 %v1423
    %1563 = vmatpush1.msra.mxu0 %v1422
    %1564 = vmatprep.subr.mxu0 %v1425
    %1565 = vmatpush1.msra.mxu0 %v1424
    %1566 = vmatprep.subr.mxu0 %v1427
    %1567 = vmatpush1.msra.mxu0 %v1426
    %1568 = vmatprep.subr.mxu0 %v1429
    %1569 = vmatpush1.msra.mxu0 %v1428
    %1570 = vmatprep.subr.mxu0 %v1431
    %1571 = vmatpush1.msra.mxu0 %v1430
    %1572 = vmatprep.mubr.f32.mxu0 %v1365
    %1573 = vmatmul.mubr.f32.gmra.mrb[0].mxu0 %v1364
    %v1574 = vpop.f32.mrb[0].mxu0
    %v1575 = vadd.f32 %v1501, %v1574
    %v1576 = vpop.f32.mrb[0].mxu0
    %v1577 = vadd.f32 %v1505, %v1576
    %1578 = vdwg.mxu0
    %1579 = vmatprep.subr.mxu0 %v1433
    %1580 = vmatpush1.msra.mxu0 %v1432
    %1581 = vmatprep.subr.mxu0 %v1435
    %1582 = vmatpush1.msra.mxu0 %v1434
    %1583 = vmatprep.subr.mxu0 %v1437
    %1584 = vmatpush1.msra.mxu0 %v1436
    %1585 = vmatprep.subr.mxu0 %v1439
    %1586 = vmatpush1.msra.mxu0 %v1438
    %1587 = vmatprep.subr.mxu0 %v1441
    %1588 = vmatpush1.msra.mxu0 %v1440
    %1589 = vmatprep.subr.mxu0 %v1443
    %1590 = vmatpush1.msra.mxu0 %v1442
    %1591 = vmatprep.subr.mxu0 %v1445
    %1592 = vmatpush1.msra.mxu0 %v1444
    %1593 = vmatprep.subr.mxu0 %v1447
    %1594 = vmatpush1.msra.mxu0 %v1446
    %1595 = vmatprep.subr.mxu0 %v1449
    %1596 = vmatpush1.msra.mxu0 %v1448
    %1597 = vmatprep.subr.mxu0 %v1451
    %1598 = vmatpush1.msra.mxu0 %v1450
    %1599 = vmatprep.subr.mxu0 %v1453
    %1600 = vmatpush1.msra.mxu0 %v1452
    %1601 = vmatprep.subr.mxu0 %v1455
    %1602 = vmatpush1.msra.mxu0 %v1454
    %1603 = vmatprep.subr.mxu0 %v1457
    %1604 = vmatpush1.msra.mxu0 %v1456
    %1605 = vmatprep.subr.mxu0 %v1459
    %1606 = vmatpush1.msra.mxu0 %v1458
    %1607 = vmatprep.subr.mxu0 %v1461
    %1608 = vmatpush1.msra.mxu0 %v1460
    %1609 = vmatprep.subr.mxu0 %v1463
    %1610 = vmatpush1.msra.mxu0 %v1462
    %1611 = vmatprep.subr.mxu0 %v1465
    %1612 = vmatpush1.msra.mxu0 %v1464
    %1613 = vmatprep.subr.mxu0 %v1467
    %1614 = vmatpush1.msra.mxu0 %v1466
    %1615 = vmatprep.subr.mxu0 %v1469
    %1616 = vmatpush1.msra.mxu0 %v1468
    %1617 = vmatprep.subr.mxu0 %v1471
    %1618 = vmatpush1.msra.mxu0 %v1470
    %1619 = vmatprep.subr.mxu0 %v1473
    %1620 = vmatpush1.msra.mxu0 %v1472
    %1621 = vmatprep.subr.mxu0 %v1475
    %1622 = vmatpush1.msra.mxu0 %v1474
    %1623 = vmatprep.subr.mxu0 %v1477
    %1624 = vmatpush1.msra.mxu0 %v1476
    %1625 = vmatprep.subr.mxu0 %v1479
    %1626 = vmatpush1.msra.mxu0 %v1478
    %1627 = vmatprep.subr.mxu0 %v1481
    %1628 = vmatpush1.msra.mxu0 %v1480
    %1629 = vmatprep.subr.mxu0 %v1483
    %1630 = vmatpush1.msra.mxu0 %v1482
    %1631 = vmatprep.subr.mxu0 %v1485
    %1632 = vmatpush1.msra.mxu0 %v1484
    %1633 = vmatprep.subr.mxu0 %v1487
    %1634 = vmatpush1.msra.mxu0 %v1486
    %1635 = vmatprep.subr.mxu0 %v1489
    %1636 = vmatpush1.msra.mxu0 %v1488
    %1637 = vmatprep.subr.mxu0 %v1491
    %1638 = vmatpush1.msra.mxu0 %v1490
    %1639 = vmatprep.subr.mxu0 %v1493
    %1640 = vmatpush1.msra.mxu0 %v1492
    %1641 = vmatprep.subr.mxu0 %v1495
    %1642 = vmatpush1.msra.mxu0 %v1494
    %1643 = vmatprep.mubr.f32.mxu0 %v1367
    %1644 = vmatmul.mubr.f32.gmra.mrb[0].mxu0 %v1366
    %v1645 = vpop.f32.mrb[0].mxu0
    %v1646 = vadd.f32 %v1575, %v1645
    %v1647 = vpop.f32.mrb[0].mxu0
    %v1648 = vadd.f32 %v1577, %v1647
    %1649 = vdwg.mxu0
    %v1650 = vmax.f32 %v1646, 0.0
    %v1651 = vmax.f32 %v1648, 0.0
    %v1652 = vsel %vm1279, %v1650, 0.0
    %v1653 = vsel %vm1279, %v1651, 0.0
    %v1654 = vadd.f32 %v1652, %v1653
    %1655 = vadd.xlane.f32.xlu0 %v1654
    %v1656 = vpop.xlane.xlu0 %1655
    %v1657 = vmul.f32 %v1650, %v1650
    %v1658 = vmul.f32 %v1651, %v1651
    %v1659 = vsel %vm1279, %v1657, 0.0
    %v1660 = vsel %vm1279, %v1658, 0.0
    %v1661 = vadd.f32 %v1659, %v1660
    %1662 = vadd.xlane.f32.xlu0 %v1661
    %v1663 = vpop.xlane.xlu0 %1662
    %v1664 = vmul.f32 %v1656, 0.0069444445
    %v1665 = vmul.f32 %v1663, 0.0069444445
    %v1666 = vmul.f32 %v1664, %v1664
    %v1667 = vsub.f32 %v1665, %v1666
    %v1668 = vsub.f32 %v1650, %v1664
    %v1669 = vsub.f32 %v1651, %v1664
    %v1670 = vadd.f32 %v1667, 1e-05
    %v1671 = vrsqrt.pop %v1670
    %v1672 = vmul.f32 %v1668, %v1671
    %v1673 = vmul.f32 %v1669, %v1671
    %v1674 = vld [vmem:[#allocation11] sm:$0x3]
    %v1676 = vlaneseq
    %v1677 = vshrl.u32 %v1676, 7
    %v1678 = vsub.s32 0, %v1677
    %v1679 = vrot.slane %v1674, %v1678
    %v1680 = vlaneseq
    %v1681 = vshrl.u32 %v1680, 7
    %v1682 = vsub.s32 1, %v1681
    %v1683 = vrot.slane %v1674, %v1682
    %v1686 = vmul.f32 %v1672, %v1679
    %v1687 = vmul.f32 %v1673, %v1683
    %v1688 = vld [vmem:[%s8] sm:$0x3]
    %v1690 = vlaneseq
    %v1691 = vshrl.u32 %v1690, 7
    %v1692 = vsub.s32 0, %v1691
    %v1693 = vrot.slane %v1688, %v1692
    %v1694 = vlaneseq
    %v1695 = vshrl.u32 %v1694, 7
    %v1696 = vsub.s32 1, %v1695
    %v1697 = vrot.slane %v1688, %v1696
    %v1700 = vadd.f32 %v1686, %v1693
    %v1701 = vadd.f32 %v1687, %v1697
    %v1702 = vld [vmem:[#allocation13] sm:$0xff]
    %v1703 = vld [vmem:[#allocation13 + $0x8] sm:$0xff]
    %v1704 = vld [vmem:[#allocation13 + $0x10] sm:$0xff]
    %v1705 = vld [vmem:[#allocation13 + $0x18] sm:$0xff]
    %v1706 = vld [vmem:[#allocation13 + $0x20] sm:$0xff]
    %v1707 = vld [vmem:[#allocation13 + $0x28] sm:$0xff]
    %v1708 = vld [vmem:[#allocation13 + $0x30] sm:$0xff]
    %v1709 = vld [vmem:[#allocation13 + $0x38] sm:$0xff]
    %v1710 = vld [vmem:[#allocation13 + $0x40] sm:$0xff]
    %v1711 = vld [vmem:[#allocation13 + $0x48] sm:$0xff]
    %v1712 = vld [vmem:[#allocation13 + $0x50] sm:$0xff]
    %v1713 = vld [vmem:[#allocation13 + $0x58] sm:$0xff]
    %v1714 = vld [vmem:[#allocation13 + $0x60] sm:$0xff]
    %v1715 = vld [vmem:[#allocation13 + $0x68] sm:$0xff]
    %v1716 = vld [vmem:[#allocation13 + $0x70] sm:$0xff]
    %v1717 = vld [vmem:[#allocation13 + $0x78] sm:$0xff]
    %v1718 = vld [vmem:[#allocation13 + $0x80] sm:$0xff]
    %v1719 = vld [vmem:[#allocation13 + $0x88] sm:$0xff]
    %v1720 = vld [vmem:[#allocation13 + $0x90] sm:$0xff]
    %v1721 = vld [vmem:[#allocation13 + $0x98] sm:$0xff]
    %v1722 = vld [vmem:[#allocation13 + $0xa0] sm:$0xff]
    %v1723 = vld [vmem:[#allocation13 + $0xa8] sm:$0xff]
    %v1724 = vld [vmem:[#allocation13 + $0xb0] sm:$0xff]
    %v1725 = vld [vmem:[#allocation13 + $0xb8] sm:$0xff]
    %v1726 = vld [vmem:[#allocation13 + $0xc0] sm:$0xff]
    %v1727 = vld [vmem:[#allocation13 + $0xc8] sm:$0xff]
    %v1728 = vld [vmem:[#allocation13 + $0xd0] sm:$0xff]
    %v1729 = vld [vmem:[#allocation13 + $0xd8] sm:$0xff]
    %v1730 = vld [vmem:[#allocation13 + $0xe0] sm:$0xff]
    %v1731 = vld [vmem:[#allocation13 + $0xe8] sm:$0xff]
    %v1732 = vld [vmem:[#allocation13 + $0xf0] sm:$0xff]
    %v1733 = vld [vmem:[#allocation13 + $0xf8] sm:$0xff]
    %v1734 = vld [vmem:[#allocation14] sm:$0x1]
    %v1736 = vlaneseq
    %v1737 = vshrl.u32 %v1736, 7
    %v1738 = vsub.s32 0, %v1737
    %v1739 = vrot.slane %v1734, %v1738
    %1741 = vmatprep.subr.mxu0 0.0
    %1742 = vmatpush1.msra.mxu0 %v1702
    %1743 = vmatprep.subr.mxu0 0.0
    %1744 = vmatpush1.msra.mxu0 %v1703
    %1745 = vmatprep.subr.mxu0 0.0
    %1746 = vmatpush1.msra.mxu0 %v1704
    %1747 = vmatprep.subr.mxu0 0.0
    %1748 = vmatpush1.msra.mxu0 %v1705
    %1749 = vmatprep.subr.mxu0 0.0
    %1750 = vmatpush1.msra.mxu0 %v1706
    %1751 = vmatprep.subr.mxu0 0.0
    %1752 = vmatpush1.msra.mxu0 %v1707
    %1753 = vmatprep.subr.mxu0 0.0
    %1754 = vmatpush1.msra.mxu0 %v1708
    %1755 = vmatprep.subr.mxu0 0.0
    %1756 = vmatpush1.msra.mxu0 %v1709
    %1757 = vmatprep.subr.mxu0 0.0
    %1758 = vmatpush1.msra.mxu0 %v1710
    %1759 = vmatprep.subr.mxu0 0.0
    %1760 = vmatpush1.msra.mxu0 %v1711
    %1761 = vmatprep.subr.mxu0 0.0
    %1762 = vmatpush1.msra.mxu0 %v1712
    %1763 = vmatprep.subr.mxu0 0.0
    %1764 = vmatpush1.msra.mxu0 %v1713
    %1765 = vmatprep.subr.mxu0 0.0
    %1766 = vmatpush1.msra.mxu0 %v1714
    %1767 = vmatprep.subr.mxu0 0.0
    %1768 = vmatpush1.msra.mxu0 %v1715
    %1769 = vmatprep.subr.mxu0 0.0
    %1770 = vmatpush1.msra.mxu0 %v1716
    %1771 = vmatprep.subr.mxu0 0.0
    %1772 = vmatpush1.msra.mxu0 %v1717
    %1773 = vmatprep.subr.mxu0 0.0
    %1774 = vmatpush1.msra.mxu0 %v1718
    %1775 = vmatprep.subr.mxu0 0.0
    %1776 = vmatpush1.msra.mxu0 %v1719
    %1777 = vmatprep.subr.mxu0 0.0
    %1778 = vmatpush1.msra.mxu0 %v1720
    %1779 = vmatprep.subr.mxu0 0.0
    %1780 = vmatpush1.msra.mxu0 %v1721
    %1781 = vmatprep.subr.mxu0 0.0
    %1782 = vmatpush1.msra.mxu0 %v1722
    %1783 = vmatprep.subr.mxu0 0.0
    %1784 = vmatpush1.msra.mxu0 %v1723
    %1785 = vmatprep.subr.mxu0 0.0
    %1786 = vmatpush1.msra.mxu0 %v1724
    %1787 = vmatprep.subr.mxu0 0.0
    %1788 = vmatpush1.msra.mxu0 %v1725
    %1789 = vmatprep.subr.mxu0 0.0
    %1790 = vmatpush1.msra.mxu0 %v1726
    %1791 = vmatprep.subr.mxu0 0.0
    %1792 = vmatpush1.msra.mxu0 %v1727
    %1793 = vmatprep.subr.mxu0 0.0
    %1794 = vmatpush1.msra.mxu0 %v1728
    %1795 = vmatprep.subr.mxu0 0.0
    %1796 = vmatpush1.msra.mxu0 %v1729
    %1797 = vmatprep.subr.mxu0 0.0
    %1798 = vmatpush1.msra.mxu0 %v1730
    %1799 = vmatprep.subr.mxu0 0.0
    %1800 = vmatpush1.msra.mxu0 %v1731
    %1801 = vmatprep.subr.mxu0 0.0
    %1802 = vmatpush1.msra.mxu0 %v1732
    %1803 = vmatprep.subr.mxu0 0.0
    %1804 = vmatpush1.msra.mxu0 %v1733
    %1805 = vmatprep.mubr.f32.mxu0 %v1701
    %1806 = vmatmul.mubr.f32.gmra.mrb[0].mxu0 %v1700
    %v1807 = vpop.f32.mrb[0].mxu0
    %v1808 = vadd.f32 %v1739, %v1807
    %v1809 = vpop.f32.mrb[0].mxu0
    %1810 = vdwg.mxu0
    %v1811 = vmax.f32 %v1808, 0.0
    %1812 = vst [vmem:[#allocation19] sm:$0x3] %v1811
    %v1813 = vld [vmem:[#allocation16] sm:$0xff]
    %v1814 = vld [vmem:[#allocation16 + $0x8] sm:$0xff]
    %v1815 = vld [vmem:[#allocation16 + $0x10] sm:$0xff]
    %v1816 = vld [vmem:[#allocation16 + $0x18] sm:$0xff]
    %v1817 = vld [vmem:[#allocation16 + $0x20] sm:$0xff]
    %v1818 = vld [vmem:[#allocation16 + $0x28] sm:$0xff]
    %v1819 = vld [vmem:[#allocation16 + $0x30] sm:$0xff]
    %v1820 = vld [vmem:[#allocation16 + $0x38] sm:$0xff]
    %v1821 = vld [vmem:[#allocation16 + $0x40] sm:$0xff]
    %v1822 = vld [vmem:[#allocation16 + $0x48] sm:$0xff]
    %v1823 = vld [vmem:[#allocation16 + $0x50] sm:$0xff]
    %v1824 = vld [vmem:[#allocation16 + $0x58] sm:$0xff]
    %v1825 = vld [vmem:[#allocation16 + $0x60] sm:$0xff]
    %v1826 = vld [vmem:[#allocation16 + $0x68] sm:$0xff]
    %v1827 = vld [vmem:[#allocation16 + $0x70] sm:$0xff]
    %v1828 = vld [vmem:[#allocation16 + $0x78] sm:$0xff]
    %v1829 = vld [vmem:[#allocation17] sm:$0x1]
    %v1831 = vlaneseq
    %v1832 = vshrl.u32 %v1831, 7
    %v1833 = vsub.s32 0, %v1832
    %v1834 = vrot.slane %v1829, %v1833
    %1836 = vmatprep.subr.mxu0 0.0
    %1837 = vmatpush1.msra.mxu0 %v1813
    %1838 = vmatprep.subr.mxu0 0.0
    %1839 = vmatpush1.msra.mxu0 %v1814
    %1840 = vmatprep.subr.mxu0 0.0
    %1841 = vmatpush1.msra.mxu0 %v1815
    %1842 = vmatprep.subr.mxu0 0.0
    %1843 = vmatpush1.msra.mxu0 %v1816
    %1844 = vmatprep.subr.mxu0 0.0
    %1845 = vmatpush1.msra.mxu0 %v1817
    %1846 = vmatprep.subr.mxu0 0.0
    %1847 = vmatpush1.msra.mxu0 %v1818
    %1848 = vmatprep.subr.mxu0 0.0
    %1849 = vmatpush1.msra.mxu0 %v1819
    %1850 = vmatprep.subr.mxu0 0.0
    %1851 = vmatpush1.msra.mxu0 %v1820
    %1852 = vmatprep.subr.mxu0 0.0
    %1853 = vmatpush1.msra.mxu0 %v1821
    %1854 = vmatprep.subr.mxu0 0.0
    %1855 = vmatpush1.msra.mxu0 %v1822
    %1856 = vmatprep.subr.mxu0 0.0
    %1857 = vmatpush1.msra.mxu0 %v1823
    %1858 = vmatprep.subr.mxu0 0.0
    %1859 = vmatpush1.msra.mxu0 %v1824
    %1860 = vmatprep.subr.mxu0 0.0
    %1861 = vmatpush1.msra.mxu0 %v1825
    %1862 = vmatprep.subr.mxu0 0.0
    %1863 = vmatpush1.msra.mxu0 %v1826
    %1864 = vmatprep.subr.mxu0 0.0
    %1865 = vmatpush1.msra.mxu0 %v1827
    %1866 = vmatprep.subr.mxu0 0.0
    %1867 = vmatpush1.msra.mxu0 %v1828
    %1868 = vmatprep.subr.mxu0 0.0
    %1869 = vmatpush1.msra.mxu0 0.0
    %1870 = vmatprep.subr.mxu0 0.0
    %1871 = vmatpush1.msra.mxu0 0.0
    %1872 = vmatprep.subr.mxu0 0.0
    %1873 = vmatpush1.msra.mxu0 0.0
    %1874 = vmatprep.subr.mxu0 0.0
    %1875 = vmatpush1.msra.mxu0 0.0
    %1876 = vmatprep.subr.mxu0 0.0
    %1877 = vmatpush1.msra.mxu0 0.0
    %1878 = vmatprep.subr.mxu0 0.0
    %1879 = vmatpush1.msra.mxu0 0.0
    %1880 = vmatprep.subr.mxu0 0.0
    %1881 = vmatpush1.msra.mxu0 0.0
    %1882 = vmatprep.subr.mxu0 0.0
    %1883 = vmatpush1.msra.mxu0 0.0
    %1884 = vmatprep.subr.mxu0 0.0
    %1885 = vmatpush1.msra.mxu0 0.0
    %1886 = vmatprep.subr.mxu0 0.0
    %1887 = vmatpush1.msra.mxu0 0.0
    %1888 = vmatprep.subr.mxu0 0.0
    %1889 = vmatpush1.msra.mxu0 0.0
    %1890 = vmatprep.subr.mxu0 0.0
    %1891 = vmatpush1.msra.mxu0 0.0
    %1892 = vmatprep.subr.mxu0 0.0
    %1893 = vmatpush1.msra.mxu0 0.0
    %1894 = vmatprep.subr.mxu0 0.0
    %1895 = vmatpush1.msra.mxu0 0.0
    %1896 = vmatprep.subr.mxu0 0.0
    %1897 = vmatpush1.msra.mxu0 0.0
    %1898 = vmatprep.subr.mxu0 0.0
    %1899 = vmatpush1.msra.mxu0 0.0
    %1900 = vmatprep.mubr.f32.mxu0 0.0
    %1901 = vmatmul.mubr.f32.gmra.mrb[0].mxu0 %v1811
    %v1902 = vpop.f32.mrb[0].mxu0
    %v1903 = vadd.f32 %v1834, %v1902
    %v1904 = vpop.f32.mrb[0].mxu0
    %1905 = vdwg.mxu0
    %1906 = vst [vmem:[#allocation20] sm:$0x3] %v1903
    // Predicated region
    $region94: #{_lambda_.1} parent=1 // pred_check
      _
    $region95: #{_lambda_.1} parent=1 // pred_check_branch
      %1908 = sbr.rel (0) target = $region97
    $region96: #{_lambda_.1} parent=1 // pred_region
      %s1910 = ssub.s32 32, 32
      %1911 = vsyncadd [#allocation4], %s1910
      %s1913 = sshll.u32 [#allocation19], 4
      %s1914 = int_to_ptr.vmem [resolvable:$true] %s1913
      %1916 = dma.vmem_to_hbm [thread:$0]  %s1914, 32, %s13, [#allocation4]
    $region97: #{_lambda_.1} parent=1 // pred_fallthru
      _
    // Predicated region
    $region98: #{_lambda_.1} parent=1 // pred_check
      _
    $region99: #{_lambda_.1} parent=1 // pred_check_branch
      %1918 = sbr.rel (0) target = $region101
    $region100: #{_lambda_.1} parent=1 // pred_region
      %s1920 = ssub.s32 32, 32
      %1921 = vsyncadd [#allocation21], %s1920
      %s1923 = sshll.u32 [#allocation20], 4
      %s1924 = int_to_ptr.vmem [resolvable:$true] %s1923
      %1926 = dma.vmem_to_hbm [thread:$0]  %s1924, 32, %s14, [#allocation21]
    $region101: #{_lambda_.1} parent=1 // pred_fallthru
      _
    // Predicated region
    $region102: #{_lambda_.1} parent=1 // pred_check
      _
    $region103: #{_lambda_.1} parent=1 // pred_check_branch
      %1928 = sbr.rel (0) target = $region105
    $region104: #{_lambda_.1} parent=1 // pred_region
      %1929 = dma.done [#allocation4], 32
    $region105: #{_lambda_.1} parent=1 // pred_fallthru
      _
    // Predicated region
    $region106: #{_lambda_.1} parent=1 // pred_check
      _
    $region107: #{_lambda_.1} parent=1 // pred_check_branch
      %1931 = sbr.rel (0) target = $region109
    $region108: #{_lambda_.1} parent=1 // pred_region
      %1932 = dma.done [#allocation21], 32
    $region109: #{_lambda_.1} parent=1 // pred_fallthru
      _
    %1933 = vsyncpa [#allocation3], 1
    %1934 = vsyncpa [#allocation6], 1
    %1935 = vsyncpa [#allocation9], 1
    %1936 = vsyncpa [#allocation12], 1
    %1937 = vsyncpa [#allocation15], 1
    %1938 = vsyncpa [#allocation18], 1
    %1939 = vsyncpa [#allocation4], 1
    %1940 = vsyncpa [#allocation21], 1

</llo_original>
